<compile_context>
chip_gen: v7x
topology: tpu7x:2x2x1
jax: 0.10.0
libtpu: 0.0.40
codegen_flags: <defaults>
</compile_context>

<pallas_src>
import jax
import jax.numpy as jnp
from jax.experimental import pallas as pl
from jax.experimental.pallas import tpu as pltpu

EMBEDDING_DIM = 512
LANE = 128


def _round_up(x, m):
    return ((x + m - 1) // m) * m


# ----------------------------- Pallas kernels ------------------------------

def _encoder_kernel(x_ref, w_ref, b_ref, o_ref, acc_ref):
    """K-tiled matmul:  o = x @ w + b.   Grid = (M tiles, K tiles)."""
    k = pl.program_id(1)

    @pl.when(k == 0)
    def _():
        acc_ref[...] = jnp.zeros_like(acc_ref)

    acc_ref[...] += jnp.dot(x_ref[...], w_ref[...],
                            preferred_element_type=jnp.float32)

    @pl.when(k == pl.num_programs(1) - 1)
    def _():
        # Bias added exactly once, in the epilogue (never inside the K loop).
        o_ref[...] = (acc_ref[...] + b_ref[...].astype(jnp.float32)).astype(o_ref.dtype)


def _encoder_svdd_kernel(x_ref, w_ref, b_ref, c_ref, o_ref, dist_ref, acc_ref):
    """Fused encoder + one-class SVDD distance epilogue."""
    k = pl.program_id(1)

    @pl.when(k == 0)
    def _():
        acc_ref[...] = jnp.zeros_like(acc_ref)

    acc_ref[...] += jnp.dot(x_ref[...], w_ref[...],
                            preferred_element_type=jnp.float32)

    @pl.when(k == pl.num_programs(1) - 1)
    def _():
        h = acc_ref[...] + b_ref[...].astype(jnp.float32)          # (TM, 512)
        o_ref[...] = h.astype(o_ref.dtype)
        diff = h - c_ref[...].astype(jnp.float32)
        d = jnp.sum(diff * diff, axis=1, keepdims=True)            # (TM, 1)
        # Broadcast across all 128 lanes so the store is lane-dense (unmasked).
        dist_ref[...] = jnp.broadcast_to(d, dist_ref.shape)


def _svdd_dist_kernel(out_ref, c_ref, dist_ref):
    """Standalone one-class distance for precomputed embeddings."""
    diff = out_ref[...].astype(jnp.float32) - c_ref[...].astype(jnp.float32)
    d = jnp.sum(diff * diff, axis=1, keepdims=True)                # (TM, 1)
    dist_ref[...] = jnp.broadcast_to(d, dist_ref.shape)            # lane-dense


# ------------------------------ wrappers -----------------------------------

def _pad_inputs(x_nchw, w, tm, tk, compute_dtype):
    """Flatten NCHW, zero-pad batch to TM multiple and D_in to TK multiple."""
    B = x_nchw.shape[0]
    x2d = x_nchw.reshape(B, -1)                                    # glue: flatten
    d_in = x2d.shape[1]
    b_pad = _round_up(B, tm)
    d_pad = _round_up(d_in, tk)
    x2d = jnp.pad(x2d, ((0, b_pad - B), (0, d_pad - d_in))).astype(compute_dtype)
    w_p = jnp.pad(w, ((0, d_pad - d_in), (0, 0))).astype(compute_dtype)
    return x2d, w_p, B, b_pad, d_pad


def _matmul_cost(b_pad, d_pad, elem_bytes):
    return pl.CostEstimate(
        flops=2 * b_pad * d_pad * EMBEDDING_DIM,
        transcendentals=0,
        bytes_accessed=(b_pad * d_pad * elem_bytes          # x
                        + d_pad * EMBEDDING_DIM * elem_bytes  # w
                        + EMBEDDING_DIM * 4                   # b
                        + b_pad * EMBEDDING_DIM * 4),         # out
    )


def deep_svdd_forward(x_nchw, w, b, *, tm=128, tk=512,
                      compute_dtype=jnp.bfloat16):
    """DeepSVDD.forward: encoder(x) -> (B, EMBEDDING_DIM)."""
    x2d, w_p, B, b_pad, d_pad = _pad_inputs(x_nchw, w, tm, tk, compute_dtype)
    n_m, n_k = b_pad // tm, d_pad // tk
    b2d = b.reshape(1, EMBEDDING_DIM).astype(jnp.float32)

    out = pl.pallas_call(
        _encoder_kernel,
        out_shape=jax.ShapeDtypeStruct((b_pad, EMBEDDING_DIM), jnp.float32),
        grid_spec=pltpu.PrefetchScalarGridSpec(
            num_scalar_prefetch=0,
            grid=(n_m, n_k),                                  # reduction axis last
            in_specs=[
                pl.BlockSpec((tm, tk), lambda i, k: (i, k)),
                pl.BlockSpec((tk, EMBEDDING_DIM), lambda i, k: (k, 0)),
                pl.BlockSpec((1, EMBEDDING_DIM), lambda i, k: (0, 0)),
            ],
            out_specs=pl.BlockSpec((tm, EMBEDDING_DIM), lambda i, k: (i, 0)),
            scratch_shapes=[pltpu.VMEM((tm, EMBEDDING_DIM), jnp.float32)],
        ),
        compiler_params=pltpu.CompilerParams(
            dimension_semantics=("parallel", "arbitrary")),
        cost_estimate=_matmul_cost(b_pad, d_pad, jnp.dtype(compute_dtype).itemsize),
    )(x2d, w_p, b2d)
    return out[:B]


def deep_svdd_forward_with_loss(x_nchw, w, b, c, *, tm=128, tk=512,
                                compute_dtype=jnp.bfloat16):
    """Fused encoder + one-class loss: returns (out, loss, dist)."""
    x2d, w_p, B, b_pad, d_pad = _pad_inputs(x_nchw, w, tm, tk, compute_dtype)
    n_m, n_k = b_pad // tm, d_pad // tk
    b2d = b.reshape(1, EMBEDDING_DIM).astype(jnp.float32)
    c2d = c.reshape(1, EMBEDDING_DIM).astype(jnp.float32)

    out, dist_slab = pl.pallas_call(
        _encoder_svdd_kernel,
        out_shape=(
            jax.ShapeDtypeStruct((b_pad, EMBEDDING_DIM), jnp.float32),
            jax.ShapeDtypeStruct((b_pad, LANE), jnp.float32),
        ),
        grid_spec=pltpu.PrefetchScalarGridSpec(
            num_scalar_prefetch=0,
            grid=(n_m, n_k),
            in_specs=[
                pl.BlockSpec((tm, tk), lambda i, k: (i, k)),
                pl.BlockSpec((tk, EMBEDDING_DIM), lambda i, k: (k, 0)),
                pl.BlockSpec((1, EMBEDDING_DIM), lambda i, k: (0, 0)),
                pl.BlockSpec((1, EMBEDDING_DIM), lambda i, k: (0, 0)),
            ],
            out_specs=[
                pl.BlockSpec((tm, EMBEDDING_DIM), lambda i, k: (i, 0)),
                pl.BlockSpec((tm, LANE), lambda i, k: (i, 0)),
            ],
            scratch_shapes=[pltpu.VMEM((tm, EMBEDDING_DIM), jnp.float32)],
        ),
        compiler_params=pltpu.CompilerParams(
            dimension_semantics=("parallel", "arbitrary")),
        cost_estimate=_matmul_cost(b_pad, d_pad, jnp.dtype(compute_dtype).itemsize),
    )(x2d, w_p, b2d, c2d)

    out = out[:B]
    dist = dist_slab[:B, 0]
    # Tiny glue reduction over B scalars: divide by the *real* B and exclude the
    # zero-padded rows (which carry a spurious ||b - c||^2 distance).
    loss = jnp.mean(dist)
    return out, loss, dist


def deep_svdd_compute_loss(outputs, c, *, tm=128):
    """One-class objective on precomputed embeddings (matches PyTorch API)."""
    B = outputs.shape[0]
    b_pad = _round_up(B, tm)
    out_p = jnp.pad(outputs.astype(jnp.float32), ((0, b_pad - B), (0, 0)))
    c2d = c.reshape(1, EMBEDDING_DIM).astype(jnp.float32)
    n_m = b_pad // tm

    dist_slab = pl.pallas_call(
        _svdd_dist_kernel,
        out_shape=jax.ShapeDtypeStruct((b_pad, LANE), jnp.float32),
        grid_spec=pltpu.PrefetchScalarGridSpec(
            num_scalar_prefetch=0,
            grid=(n_m,),
            in_specs=[
                pl.BlockSpec((tm, EMBEDDING_DIM), lambda i: (i, 0)),
                pl.BlockSpec((1, EMBEDDING_DIM), lambda i: (0, 0)),
            ],
            out_specs=pl.BlockSpec((tm, LANE), lambda i: (i, 0)),
        ),
        compiler_params=pltpu.CompilerParams(
            dimension_semantics=("parallel",)),
    )(out_p, c2d)

    dist = dist_slab[:B, 0]
    loss = jnp.mean(dist)                                          # real-B mean
    return loss, dist


# ------------------------------- main --------------------------------------

if __name__ == "__main__":
    key = jax.random.PRNGKey(0)
    k_x, k_w, k_b, k_c = jax.random.split(key, 4)

    # Small shapes consistent with an NCHW conv-style input.
    B, C, H, W = 2, 4, 16, 16
    D_IN = C * H * W  # 1024

    x = jax.random.normal(k_x, (B, C, H, W), dtype=jnp.float32)
    w = jax.random.normal(k_w, (D_IN, EMBEDDING_DIM), dtype=jnp.float32) * 0.02
    b = jax.random.normal(k_b, (EMBEDDING_DIM,), dtype=jnp.float32) * 0.02
    c = jax.random.normal(k_c, (EMBEDDING_DIM,), dtype=jnp.float32)

    # Forward pass (DeepSVDD.forward equivalent) + compute_loss ('one-class').
    out = jax.block_until_ready(deep_svdd_forward(x, w, b))
    loss, dist = jax.block_until_ready(deep_svdd_compute_loss(out, c))

    # Fused forward + loss (single kernel, no HBM round-trip of embeddings).
    out_f, loss_f, dist_f = jax.block_until_ready(
        deep_svdd_forward_with_loss(x, w, b, c))

    # Reference in plain JAX (f32, highest-precision matmul).
    x2d = x.reshape(B, -1)
    out_ref = jnp.dot(x2d, w, precision=jax.lax.Precision.HIGHEST) + b[None, :]
    dist_ref = jnp.sum((out_ref - c[None, :]) ** 2, axis=1)
    loss_ref = jnp.mean(dist_ref)

    assert out.shape == (B, EMBEDDING_DIM) and dist.shape == (B,)
    assert out_f.shape == (B, EMBEDDING_DIM) and dist_f.shape == (B,)
    # bf16 matmul inputs -> relaxed tolerance vs. the f32 reference.
    assert jnp.allclose(out, out_ref, atol=5e-2, rtol=5e-2)
    assert jnp.allclose(out_f, out_ref, atol=5e-2, rtol=5e-2)
    assert jnp.allclose(dist, dist_ref, rtol=2e-2, atol=1e-1)
    assert jnp.allclose(dist_f, dist_ref, rtol=2e-2, atol=1e-1)
    assert jnp.allclose(loss, loss_ref, rtol=2e-2, atol=1e-1)
    assert jnp.allclose(loss_f, loss_ref, rtol=2e-2, atol=1e-1)

    print("KERNEL_OK")
</pallas_src>

<mosaic_0001>
module attributes {stable_mosaic.version = 11 : i64} {
  func.func @_encoder_kernel(%arg0: i32, %arg1: i32, %arg2: memref<128x512xbf16, #tpu.memory_space<vmem>>, %arg3: memref<512x512xbf16, #tpu.memory_space<vmem>>, %arg4: memref<1x512xf32, #tpu.memory_space<vmem>>, %arg5: memref<128x512xf32, #tpu.memory_space<vmem>>, %arg6: memref<128x512xf32, #tpu.memory_space<vmem>>) attributes {dimension_semantics = [#tpu.dimension_semantics<parallel>, #tpu.dimension_semantics<arbitrary>], iteration_bounds = array<i64: 1, 2>, scalar_prefetch = 0 : i64, scratch_operands = 1 : i64, tpu.core_type = #tpu.core_type<tc>, window_params = [{transform_indices = @transform_0, window_bounds = array<i64: 128, 512>}, {transform_indices = @transform_1, window_bounds = array<i64: 512, 512>}, {pipeline_mode = #tpu.pipeline_mode<synchronous>, transform_indices = @transform_2, window_bounds = array<i64: 1, 512>}, {transform_indices = @transform_3, window_bounds = array<i64: 128, 512>}]} {
    %c0_i32 = arith.constant 0 : i32
    %0 = arith.cmpi eq, %arg1, %c0_i32 : i32
    %1 = arith.extui %0 : i1 to i32
    %c0_i32_0 = arith.constant 0 : i32
    %2 = arith.cmpi ne, %1, %c0_i32_0 : i32
    scf.if %2 {
      %cst_9 = arith.constant 0.000000e+00 : f32
      %12 = vector.broadcast %cst_9 : f32 to vector<128x512xf32>
      %c0_10 = arith.constant 0 : index
      %c0_11 = arith.constant 0 : index
      %13 = vector.load %arg6[%c0_10, %c0_11] : memref<128x512xf32, #tpu.memory_space<vmem>>, vector<128x512xf32>
      tpu.vector_store %arg6[%c0_10, %c0_11], %12 {strides = array<i32>} : memref<128x512xf32, #tpu.memory_space<vmem>>, vector<128x512xf32>,
    } else {
    }
    %c0 = arith.constant 0 : index
    %c0_1 = arith.constant 0 : index
    %3 = vector.load %arg6[%c0, %c0_1] : memref<128x512xf32, #tpu.memory_space<vmem>>, vector<128x512xf32>
    %c0_2 = arith.constant 0 : index
    %c0_3 = arith.constant 0 : index
    %4 = vector.load %arg2[%c0_2, %c0_3] : memref<128x512xbf16, #tpu.memory_space<vmem>>, vector<128x512xbf16>
    %c0_4 = arith.constant 0 : index
    %c0_5 = arith.constant 0 : index
    %5 = vector.load %arg3[%c0_4, %c0_5] : memref<512x512xbf16, #tpu.memory_space<vmem>>, vector<512x512xbf16>
    %cst = arith.constant dense<0.000000e+00> : vector<128x512xf32>
    %6 = tpu.matmul %4, %5, %cst {dimension_numbers = #tpu.dot_dimension_numbers<[1], [0], [0], [1], [0, 0, 1, 1], [], []>} : vector<128x512xbf16>, vector<512x512xbf16>, vector<128x512xf32> -> vector<128x512xf32>
    %7 = arith.addf %3, %6 : vector<128x512xf32>
    %c0_6 = arith.constant 0 : index
    %c0_7 = arith.constant 0 : index
    %8 = vector.load %arg6[%c0_6, %c0_7] : memref<128x512xf32, #tpu.memory_space<vmem>>, vector<128x512xf32>
    tpu.vector_store %arg6[%c0_6, %c0_7], %7 {strides = array<i32>} : memref<128x512xf32, #tpu.memory_space<vmem>>, vector<128x512xf32>,
    %c1_i32 = arith.constant 1 : i32
    %9 = arith.cmpi eq, %arg1, %c1_i32 : i32
    %10 = arith.extui %9 : i1 to i32
    %c0_i32_8 = arith.constant 0 : i32
    %11 = arith.cmpi ne, %10, %c0_i32_8 : i32
    scf.if %11 {
      %c0_9 = arith.constant 0 : index
      %c0_10 = arith.constant 0 : index
      %12 = vector.load %arg6[%c0_9, %c0_10] : memref<128x512xf32, #tpu.memory_space<vmem>>, vector<128x512xf32>
      %c0_11 = arith.constant 0 : index
      %c0_12 = arith.constant 0 : index
      %13 = vector.load %arg4[%c0_11, %c0_12] : memref<1x512xf32, #tpu.memory_space<vmem>>, vector<1x512xf32>
      %14 = vector.broadcast %13 : vector<1x512xf32> to vector<128x512xf32>
      %15 = arith.addf %12, %14 : vector<128x512xf32>
      %c0_13 = arith.constant 0 : index
      %c0_14 = arith.constant 0 : index
      %16 = vector.load %arg5[%c0_13, %c0_14] : memref<128x512xf32, #tpu.memory_space<vmem>>, vector<128x512xf32>
      tpu.vector_store %arg5[%c0_13, %c0_14], %15 {strides = array<i32>} : memref<128x512xf32, #tpu.memory_space<vmem>>, vector<128x512xf32>,
    } else {
    }
    return
  }
  func.func @transform_0(%arg0: i32, %arg1: i32) -> (i32, i32) {
    %c0_i32 = arith.constant 0 : i32
    return %arg0, %arg1 : i32, i32
  }
  func.func @transform_1(%arg0: i32, %arg1: i32) -> (i32, i32) {
    %c0_i32 = arith.constant 0 : i32
    %c0_i32_0 = arith.constant 0 : i32
    return %arg1, %c0_i32 : i32, i32
  }
  func.func @transform_2(%arg0: i32, %arg1: i32) -> (i32, i32) {
    %c0_i32 = arith.constant 0 : i32
    %c0_i32_0 = arith.constant 0 : i32
    %c0_i32_1 = arith.constant 0 : i32
    return %c0_i32, %c0_i32_0 : i32, i32
  }
  func.func @transform_3(%arg0: i32, %arg1: i32) -> (i32, i32) {
    %c0_i32 = arith.constant 0 : i32
    %c0_i32_0 = arith.constant 0 : i32
    return %arg0, %c0_i32 : i32, i32
  }
}

</mosaic_0001>

<llo_original>
// kernel: tpu_custom_call.1
$region0: #{tpu_custom_call.1}
  #allocation0 [shape = 'u32[]', space=smem, size = 0x4, offset = 0x4, fixed_abs, tag = 'smem constant byte address 0x4 - core index']
  #allocation1 [shape = 'u32[144,128]{1,0:T(1,128)}', space=vmem, size = 0x12000, scoped, tag = 'internal scratch']
  #allocation2 [shape = 'f32[128,512]{1,0:T(8,128)}', space=vmem, size = 0x40000, scoped, tag = 'scratch operand']
  %s0 = inlined_call_operand.hbm [shape: bf16[128,1024], index: 0, kind: input, shape index: {}]
  %s1 = inlined_call_operand.hbm [shape: bf16[1024,512], index: 1, kind: input, shape index: {}]
  %s2 = inlined_call_operand.vmem [shape: f32[1,512], index: 2, kind: input, shape index: {}]
  %s3 = inlined_call_operand.hbm [shape: f32[128,512], index: 3, kind: output, shape index: {}]
  %s4 = sld [smem:[#allocation0]]
  $region61: #{tpu_custom_call.1} parent=0
    _
  %s6 = ssub.s32 1, %s4
  %s7 = scalar_select 0, %s6, %s4
  $region1: #{tpu_custom_call.1} parent=0
    #allocation3 [shape = 'u8[262144]{0}', space=vmem, size = 0x40000, scoped, tag = 'input window, operand 0']
    #allocation4 [shape = 's32[2]{0}', space=sflag, size = 0x8, scoped, tag = 'scoped memory for tpu_custom_call.1']
    #allocation5 [shape = 's32[2]{0}', space=sflag, size = 0x8, scoped, tag = 'scoped memory for tpu_custom_call.1']
    #allocation6 [shape = 'u8[1048576]{0}', space=vmem, size = 0x100000, scoped, tag = 'input window, operand 1']
    #allocation7 [shape = 's32[2]{0}', space=sflag, size = 0x8, scoped, tag = 'scoped memory for tpu_custom_call.1']
    #allocation8 [shape = 'u8[262144]{0}', space=vmem, size = 0x40000, scoped, tag = 'output window, operand 0, single buffered']
    %8 = vsyncpa [#allocation4], 0
    %s9 = scalar_lea.sflag [#allocation4], 1
    %10 = vsyncpa %s9, 0
    %11 = vsyncpa [#allocation7], 0
    %s12 = scalar_lea.sflag [#allocation7], 1
    %13 = vsyncpa %s12, 0
    %14 = vsyncpa [#allocation5], 0
    loop: start=0, step=1, limit=4
    $region2: #{tpu_custom_call.1} parent=1 // loop_pre_header
      _
    $region3: #{tpu_custom_call.1} parent=1 // loop_header
      %s16 = sphi 0, %s20
      %p17 = scmp.ge.s32.totalorder %s16, 4
      %s23 = sphi 0, %s35
      %s24 = sphi 0, %s31
      %s25 = sphi 0, %s23
      %s26 = sphi 0, %s24
      %s27 = sphi 0, %s25
      %s28 = sphi 0, %s26
      %s40 = sphi 0, %s42
      %s43 = sphi 0, %s40
      %s44 = sphi 0, %s43
      %s60 = sphi 0, %s44
      %s66 = sphi 0, %s68
      %s69 = sphi 0, %s66
      %s70 = sphi 0, %s69
      %s86 = sphi 0, %s70
      %s90 = sphi 0, %s90
      %s92 = sphi 0, %s90
      %s93 = sphi 0, %s92
      %s107 = sphi 0, %s93
      %s113 = sphi 0, %s115
      %s116 = sphi 0, %s113
      %s117 = sphi 0, %s116
      %s133 = sphi 0, %s117
    $region4: #{tpu_custom_call.1} parent=1 // loop_header_branch
      %19 = sbr.rel (%p17) target = $region8
    $region5: #{tpu_custom_call.1} parent=1 // loop_body
      %s21 = ssub.s32 %s16, 1
      %s22 = ssub.s32 %s16, 2
      %s29 = sadd.s32 1, %s24
      %p30 = scmp.ge.s32.totalorder %s29, 2
      %s31 = scalar_select %p30, 0, %s29
      %s32 = sadd.s32 1, %s23
      %s33 = scalar_select %p30, %s32, %s23
      %p34 = scmp.ge.s32.totalorder %s33, 1
      %s35 = scalar_select %p34, 0, %s33
      %s36 = ssub.s32 %s23, %s35
      %s37 = ssub.s32 %s24, %s31
      %s38 = sor.u32 %s36, %s37
      %p39 = scmp.eq.s32.totalorder %s38, 0
      %s41 = sadd.s32 %s40, 1
      %s42 = scalar_select %p39, %s40, %s41
      %p45 = pneg %p39
      %p46 = scmp.eq.s32.totalorder %s16, 1
      %p47 = por %p45, %p46
      %p48 = scmp.ne.s32.totalorder %s40, %s43
      %p49 = scmp.eq.s32.totalorder %s16, 0
      %p50 = por %p48, %p49
      %p51 = scmp.ne.s32.totalorder %s40, %s43
      %p52 = scmp.eq.s32.totalorder %s21, 1
      %p53 = por %p51, %p52
      %p54 = scmp.ne.s32.totalorder %s43, %s44
      %p55 = scmp.eq.s32.totalorder %s21, 0
      %p56 = por %p54, %p55
      %p57 = scmp.ne.s32.totalorder %s43, %s44
      %p58 = scmp.eq.s32.totalorder %s22, 1
      %p59 = por %p57, %p58
      %p61 = scmp.ne.s32.totalorder %s44, %s60
      %p62 = scmp.eq.s32.totalorder %s22, 0
      %p63 = por %p61, %p62
      %s64 = ssub.s32 %s24, %s31
      %p65 = scmp.eq.s32.totalorder %s64, 0
      %s67 = sadd.s32 %s66, 1
      %s68 = scalar_select %p65, %s66, %s67
      %p71 = pneg %p65
      %p72 = scmp.eq.s32.totalorder %s16, 1
      %p73 = por %p71, %p72
      %p74 = scmp.ne.s32.totalorder %s66, %s69
      %p75 = scmp.eq.s32.totalorder %s16, 0
      %p76 = por %p74, %p75
      %p77 = scmp.ne.s32.totalorder %s66, %s69
      %p78 = scmp.eq.s32.totalorder %s21, 1
      %p79 = por %p77, %p78
      %p80 = scmp.ne.s32.totalorder %s69, %s70
      %p81 = scmp.eq.s32.totalorder %s21, 0
      %p82 = por %p80, %p81
      %p83 = scmp.ne.s32.totalorder %s69, %s70
      %p84 = scmp.eq.s32.totalorder %s22, 1
      %p85 = por %p83, %p84
      %p87 = scmp.ne.s32.totalorder %s70, %s86
      %p88 = scmp.eq.s32.totalorder %s22, 0
      %p89 = por %p87, %p88
      %s91 = sadd.s32 %s90, 1
      %p94 = scmp.eq.s32.totalorder %s16, 1
      %p95 = scmp.ne.s32.totalorder %s90, %s92
      %p96 = scmp.eq.s32.totalorder %s16, 0
      %p97 = por %p95, %p96
      %p98 = scmp.ne.s32.totalorder %s90, %s92
      %p99 = scmp.eq.s32.totalorder %s21, 1
      %p100 = por %p98, %p99
      %p101 = scmp.ne.s32.totalorder %s92, %s93
      %p102 = scmp.eq.s32.totalorder %s21, 0
      %p103 = por %p101, %p102
      %p104 = scmp.ne.s32.totalorder %s92, %s93
      %p105 = scmp.eq.s32.totalorder %s22, 1
      %p106 = por %p104, %p105
      %p108 = scmp.ne.s32.totalorder %s93, %s107
      %p109 = scmp.eq.s32.totalorder %s22, 0
      %p110 = por %p108, %p109
      %s111 = ssub.s32 %s23, %s35
      %p112 = scmp.eq.s32.totalorder %s111, 0
      %s114 = sadd.s32 %s113, 1
      %s115 = scalar_select %p112, %s113, %s114
      %p118 = pneg %p112
      %p119 = scmp.eq.s32.totalorder %s16, 1
      %p120 = por %p118, %p119
      %p121 = scmp.ne.s32.totalorder %s113, %s116
      %p122 = scmp.eq.s32.totalorder %s16, 0
      %p123 = por %p121, %p122
      %p124 = scmp.ne.s32.totalorder %s113, %s116
      %p125 = scmp.eq.s32.totalorder %s21, 1
      %p126 = por %p124, %p125
      %p127 = scmp.ne.s32.totalorder %s116, %s117
      %p128 = scmp.eq.s32.totalorder %s21, 0
      %p129 = por %p127, %p128
      %p130 = scmp.ne.s32.totalorder %s116, %s117
      %p131 = scmp.eq.s32.totalorder %s22, 1
      %p132 = por %p130, %p131
      %p134 = scmp.ne.s32.totalorder %s117, %s133
      %p135 = scmp.eq.s32.totalorder %s22, 0
      %p136 = por %p134, %p135
      %p137 = scmp.le.s32.totalorder 1, %s16
      %p138 = scmp.lt.s32.totalorder %s16, 3
      %p139 = pnand %p137, %p138
      %p140 = pneg %p139
      // Predicated region
      $region9: #{tpu_custom_call.1} parent=5 // pred_check
        _
      $region10: #{tpu_custom_call.1} parent=5 // pred_check_branch
        %142 = sbr.rel (%p139) target = $region12
      $region11: #{tpu_custom_call.1} parent=5 // pred_region
        %s143 = ssub.s32 %s16, 1
        // Predicated region
        $region13: #{tpu_custom_call.1} parent=11 // pred_check
          %p144 = pneg %p103
        $region14: #{tpu_custom_call.1} parent=11 // pred_check_branch
          %146 = sbr.rel (%p144) target = $region16
        $region15: #{tpu_custom_call.1} parent=11 // pred_region
          _
        $region16: #{tpu_custom_call.1} parent=11 // pred_fallthru
          _
      $region12: #{tpu_custom_call.1} parent=5 // pred_fallthru
        _
      %p147 = scmp.lt.s32.totalorder %s16, 2
      // Predicated region
      $region17: #{tpu_custom_call.1} parent=5 // pred_check
        %p148 = pneg %p147
      $region18: #{tpu_custom_call.1} parent=5 // pred_check_branch
        %150 = sbr.rel (%p148) target = $region20
      $region19: #{tpu_custom_call.1} parent=5 // pred_region
        // Predicated region
        $region21: #{tpu_custom_call.1} parent=19 // pred_check
          %p151 = pneg %p50
        $region22: #{tpu_custom_call.1} parent=19 // pred_check_branch
          %153 = sbr.rel (%p151) target = $region24
        $region23: #{tpu_custom_call.1} parent=19 // pred_region
          %s154 = sand.u32 %s40, 1
          %s155 = scalar_lea.sflag [#allocation4], %s154
          %s156 = sand.u32 %s40, 1
          %s157 = smul.addr %s156, 256
          %s158 = scalar_lea.vmem [#allocation3], %s157
          %s159 = smul.u32 16, %s23
          %s160 = smul.u32 4, %s24
          %s162 = ssub.s32 4096, 4096
          %163 = vsyncadd %s155, %s162
          %s164 = smul.addr %s159, 8
          %s165 = sadd.s32 %s160, %s164
          %s166 = smul.addr %s165, 64
          %s167 = scalar_lea.hbm %s0, %s166
          %s168 = sshll.u32 %s158, 4
          %s169 = int_to_ptr.vmem [resolvable:$true] %s168
          %174 = dma.hbm_to_vmem [thread:$0]  %s167, 4096, %s169, %s155, 512, 256, 16
        $region24: #{tpu_custom_call.1} parent=19 // pred_fallthru
          _
        // Predicated region
        $region25: #{tpu_custom_call.1} parent=19 // pred_check
          %p175 = pneg %p76
        $region26: #{tpu_custom_call.1} parent=19 // pred_check_branch
          %177 = sbr.rel (%p175) target = $region28
        $region27: #{tpu_custom_call.1} parent=19 // pred_region
          %s178 = sand.u32 %s66, 1
          %s179 = scalar_lea.sflag [#allocation7], %s178
          %s180 = sand.u32 %s66, 1
          %s181 = smul.addr %s180, 1024
          %s182 = scalar_lea.vmem [#allocation6], %s181
          %s183 = smul.u32 64, %s24
          %s185 = ssub.s32 16384, 16384
          %186 = vsyncadd %s179, %s185
          %s187 = smul.addr %s183, 4
          %s188 = smul.addr %s187, 64
          %s189 = scalar_lea.hbm %s1, %s188
          %s190 = sshll.u32 %s182, 4
          %s191 = int_to_ptr.vmem [resolvable:$true] %s190
          %196 = dma.hbm_to_vmem [thread:$0]  %s189, 16384, %s191, %s179, 256, 256, 16
        $region28: #{tpu_custom_call.1} parent=19 // pred_fallthru
          _
      $region20: #{tpu_custom_call.1} parent=5 // pred_fallthru
        _
      %p197 = scmp.le.s32.totalorder 1, %s16
      %p198 = scmp.lt.s32.totalorder %s16, 3
      %p199 = pnand %p197, %p198
      %p200 = pneg %p199
      // Predicated region
      $region29: #{tpu_custom_call.1} parent=5 // pred_check
        _
      $region30: #{tpu_custom_call.1} parent=5 // pred_check_branch
        %202 = sbr.rel (%p199) target = $region32
      $region31: #{tpu_custom_call.1} parent=5 // pred_region
        %s203 = ssub.s32 %s16, 1
        %s204 = sand.u32 %s43, 1
        %s205 = scalar_lea.sflag [#allocation4], %s204
        %s206 = sand.u32 %s43, 1
        %s207 = smul.addr %s206, 256
        %s208 = scalar_lea.vmem [#allocation3], %s207
        // Predicated region
        $region33: #{tpu_custom_call.1} parent=31 // pred_check
          %p209 = pneg %p56
        $region34: #{tpu_custom_call.1} parent=31 // pred_check_branch
          %211 = sbr.rel (%p209) target = $region36
        $region35: #{tpu_custom_call.1} parent=31 // pred_region
          %212 = dma.done %s205, 4096
        $region36: #{tpu_custom_call.1} parent=31 // pred_fallthru
          _
        %s213 = sand.u32 %s69, 1
        %s214 = scalar_lea.sflag [#allocation7], %s213
        %s215 = sand.u32 %s69, 1
        %s216 = smul.addr %s215, 1024
        %s217 = scalar_lea.vmem [#allocation6], %s216
        // Predicated region
        $region37: #{tpu_custom_call.1} parent=31 // pred_check
          %p218 = pneg %p82
        $region38: #{tpu_custom_call.1} parent=31 // pred_check_branch
          %220 = sbr.rel (%p218) target = $region40
        $region39: #{tpu_custom_call.1} parent=31 // pred_region
          %221 = dma.done %s214, 16384
        $region40: #{tpu_custom_call.1} parent=31 // pred_fallthru
          _
        %s222 = sand.u32 %s43, 1
        %s223 = scalar_lea.sflag [#allocation4], %s222
        %s224 = sand.u32 %s43, 1
        %s225 = smul.addr %s224, 256
        %s226 = scalar_lea.vmem [#allocation3], %s225
        %p227 = pneg %p56
        %p228 = pneg %p53
        %s229 = sand.u32 %s69, 1
        %s230 = scalar_lea.sflag [#allocation7], %s229
        %s231 = sand.u32 %s69, 1
        %s232 = smul.addr %s231, 1024
        %s233 = scalar_lea.vmem [#allocation6], %s232
        %p234 = pneg %p82
        %p235 = pneg %p79
        %p236 = pneg %p103
        %p237 = pneg %p100
        %p238 = pneg %p129
        %p239 = pneg %p126
        %s240 = smul.u32 16, %s25
        %s241 = smul.u32 4, %s26
        %s242 = smul.u32 64, %s26
        %s243 = smul.u32 16, %s25
        %p244 = scmp.eq.s32.totalorder %s26, 0
        // Predicated region
        $region41: #{tpu_custom_call.1} parent=31 // pred_check
          %p245 = pneg %p244
        $region42: #{tpu_custom_call.1} parent=31 // pred_check_branch
          %247 = sbr.rel (%p245) target = $region44
        $region43: #{tpu_custom_call.1} parent=31 // pred_region
          %248 = vst [vmem:[#allocation2] sm:$0xff] 0.0
          %249 = vst [vmem:[#allocation2 + $0x8] sm:$0xff] 0.0
          %250 = vst [vmem:[#allocation2 + $0x10] sm:$0xff] 0.0
          %251 = vst [vmem:[#allocation2 + $0x18] sm:$0xff] 0.0
          %252 = vst [vmem:[#allocation2 + $0x20] sm:$0xff] 0.0
          %253 = vst [vmem:[#allocation2 + $0x28] sm:$0xff] 0.0
          %254 = vst [vmem:[#allocation2 + $0x30] sm:$0xff] 0.0
          %255 = vst [vmem:[#allocation2 + $0x38] sm:$0xff] 0.0
          %256 = vst [vmem:[#allocation2 + $0x40] sm:$0xff] 0.0
          %257 = vst [vmem:[#allocation2 + $0x48] sm:$0xff] 0.0
          %258 = vst [vmem:[#allocation2 + $0x50] sm:$0xff] 0.0
          %259 = vst [vmem:[#allocation2 + $0x58] sm:$0xff] 0.0
          %260 = vst [vmem:[#allocation2 + $0x60] sm:$0xff] 0.0
          %261 = vst [vmem:[#allocation2 + $0x68] sm:$0xff] 0.0
          %262 = vst [vmem:[#allocation2 + $0x70] sm:$0xff] 0.0
          %263 = vst [vmem:[#allocation2 + $0x78] sm:$0xff] 0.0
          %264 = vst [vmem:[#allocation2 + $0x80] sm:$0xff] 0.0
          %265 = vst [vmem:[#allocation2 + $0x88] sm:$0xff] 0.0
          %266 = vst [vmem:[#allocation2 + $0x90] sm:$0xff] 0.0
          %267 = vst [vmem:[#allocation2 + $0x98] sm:$0xff] 0.0
          %268 = vst [vmem:[#allocation2 + $0xa0] sm:$0xff] 0.0
          %269 = vst [vmem:[#allocation2 + $0xa8] sm:$0xff] 0.0
          %270 = vst [vmem:[#allocation2 + $0xb0] sm:$0xff] 0.0
          %271 = vst [vmem:[#allocation2 + $0xb8] sm:$0xff] 0.0
          %272 = vst [vmem:[#allocation2 + $0xc0] sm:$0xff] 0.0
          %273 = vst [vmem:[#allocation2 + $0xc8] sm:$0xff] 0.0
          %274 = vst [vmem:[#allocation2 + $0xd0] sm:$0xff] 0.0
          %275 = vst [vmem:[#allocation2 + $0xd8] sm:$0xff] 0.0
          %276 = vst [vmem:[#allocation2 + $0xe0] sm:$0xff] 0.0
          %277 = vst [vmem:[#allocation2 + $0xe8] sm:$0xff] 0.0
          %278 = vst [vmem:[#allocation2 + $0xf0] sm:$0xff] 0.0
          %279 = vst [vmem:[#allocation2 + $0xf8] sm:$0xff] 0.0
          %280 = vst [vmem:[#allocation2 + $0x100] sm:$0xff] 0.0
          %281 = vst [vmem:[#allocation2 + $0x108] sm:$0xff] 0.0
          %282 = vst [vmem:[#allocation2 + $0x110] sm:$0xff] 0.0
          %283 = vst [vmem:[#allocation2 + $0x118] sm:$0xff] 0.0
          %284 = vst [vmem:[#allocation2 + $0x120] sm:$0xff] 0.0
          %285 = vst [vmem:[#allocation2 + $0x128] sm:$0xff] 0.0
          %286 = vst [vmem:[#allocation2 + $0x130] sm:$0xff] 0.0
          %287 = vst [vmem:[#allocation2 + $0x138] sm:$0xff] 0.0
          %288 = vst [vmem:[#allocation2 + $0x140] sm:$0xff] 0.0
          %289 = vst [vmem:[#allocation2 + $0x148] sm:$0xff] 0.0
          %290 = vst [vmem:[#allocation2 + $0x150] sm:$0xff] 0.0
          %291 = vst [vmem:[#allocation2 + $0x158] sm:$0xff] 0.0
          %292 = vst [vmem:[#allocation2 + $0x160] sm:$0xff] 0.0
          %293 = vst [vmem:[#allocation2 + $0x168] sm:$0xff] 0.0
          %294 = vst [vmem:[#allocation2 + $0x170] sm:$0xff] 0.0
          %295 = vst [vmem:[#allocation2 + $0x178] sm:$0xff] 0.0
          %296 = vst [vmem:[#allocation2 + $0x180] sm:$0xff] 0.0
          %297 = vst [vmem:[#allocation2 + $0x188] sm:$0xff] 0.0
          %298 = vst [vmem:[#allocation2 + $0x190] sm:$0xff] 0.0
          %299 = vst [vmem:[#allocation2 + $0x198] sm:$0xff] 0.0
          %300 = vst [vmem:[#allocation2 + $0x1a0] sm:$0xff] 0.0
          %301 = vst [vmem:[#allocation2 + $0x1a8] sm:$0xff] 0.0
          %302 = vst [vmem:[#allocation2 + $0x1b0] sm:$0xff] 0.0
          %303 = vst [vmem:[#allocation2 + $0x1b8] sm:$0xff] 0.0
          %304 = vst [vmem:[#allocation2 + $0x1c0] sm:$0xff] 0.0
          %305 = vst [vmem:[#allocation2 + $0x1c8] sm:$0xff] 0.0
          %306 = vst [vmem:[#allocation2 + $0x1d0] sm:$0xff] 0.0
          %307 = vst [vmem:[#allocation2 + $0x1d8] sm:$0xff] 0.0
          %308 = vst [vmem:[#allocation2 + $0x1e0] sm:$0xff] 0.0
          %309 = vst [vmem:[#allocation2 + $0x1e8] sm:$0xff] 0.0
          %310 = vst [vmem:[#allocation2 + $0x1f0] sm:$0xff] 0.0
          %311 = vst [vmem:[#allocation2 + $0x1f8] sm:$0xff] 0.0
        $region44: #{tpu_custom_call.1} parent=31 // pred_fallthru
          _
        %v312 = vld [vmem:[#allocation2] sm:$0xff]
        %v313 = vld [vmem:[#allocation2 + $0x8] sm:$0xff]
        %v314 = vld [vmem:[#allocation2 + $0x10] sm:$0xff]
        %v315 = vld [vmem:[#allocation2 + $0x18] sm:$0xff]
        %v316 = vld [vmem:[#allocation2 + $0x20] sm:$0xff]
        %v317 = vld [vmem:[#allocation2 + $0x28] sm:$0xff]
        %v318 = vld [vmem:[#allocation2 + $0x30] sm:$0xff]
        %v319 = vld [vmem:[#allocation2 + $0x38] sm:$0xff]
        %v320 = vld [vmem:[#allocation2 + $0x40] sm:$0xff]
        %v321 = vld [vmem:[#allocation2 + $0x48] sm:$0xff]
        %v322 = vld [vmem:[#allocation2 + $0x50] sm:$0xff]
        %v323 = vld [vmem:[#allocation2 + $0x58] sm:$0xff]
        %v324 = vld [vmem:[#allocation2 + $0x60] sm:$0xff]
        %v325 = vld [vmem:[#allocation2 + $0x68] sm:$0xff]
        %v326 = vld [vmem:[#allocation2 + $0x70] sm:$0xff]
        %v327 = vld [vmem:[#allocation2 + $0x78] sm:$0xff]
        %v328 = vld [vmem:[#allocation2 + $0x80] sm:$0xff]
        %v329 = vld [vmem:[#allocation2 + $0x88] sm:$0xff]
        %v330 = vld [vmem:[#allocation2 + $0x90] sm:$0xff]
        %v331 = vld [vmem:[#allocation2 + $0x98] sm:$0xff]
        %v332 = vld [vmem:[#allocation2 + $0xa0] sm:$0xff]
        %v333 = vld [vmem:[#allocation2 + $0xa8] sm:$0xff]
        %v334 = vld [vmem:[#allocation2 + $0xb0] sm:$0xff]
        %v335 = vld [vmem:[#allocation2 + $0xb8] sm:$0xff]
        %v336 = vld [vmem:[#allocation2 + $0xc0] sm:$0xff]
        %v337 = vld [vmem:[#allocation2 + $0xc8] sm:$0xff]
        %v338 = vld [vmem:[#allocation2 + $0xd0] sm:$0xff]
        %v339 = vld [vmem:[#allocation2 + $0xd8] sm:$0xff]
        %v340 = vld [vmem:[#allocation2 + $0xe0] sm:$0xff]
        %v341 = vld [vmem:[#allocation2 + $0xe8] sm:$0xff]
        %v342 = vld [vmem:[#allocation2 + $0xf0] sm:$0xff]
        %v343 = vld [vmem:[#allocation2 + $0xf8] sm:$0xff]
        %v344 = vld [vmem:[#allocation2 + $0x100] sm:$0xff]
        %v345 = vld [vmem:[#allocation2 + $0x108] sm:$0xff]
        %v346 = vld [vmem:[#allocation2 + $0x110] sm:$0xff]
        %v347 = vld [vmem:[#allocation2 + $0x118] sm:$0xff]
        %v348 = vld [vmem:[#allocation2 + $0x120] sm:$0xff]
        %v349 = vld [vmem:[#allocation2 + $0x128] sm:$0xff]
        %v350 = vld [vmem:[#allocation2 + $0x130] sm:$0xff]
        %v351 = vld [vmem:[#allocation2 + $0x138] sm:$0xff]
        %v352 = vld [vmem:[#allocation2 + $0x140] sm:$0xff]
        %v353 = vld [vmem:[#allocation2 + $0x148] sm:$0xff]
        %v354 = vld [vmem:[#allocation2 + $0x150] sm:$0xff]
        %v355 = vld [vmem:[#allocation2 + $0x158] sm:$0xff]
        %v356 = vld [vmem:[#allocation2 + $0x160] sm:$0xff]
        %v357 = vld [vmem:[#allocation2 + $0x168] sm:$0xff]
        %v358 = vld [vmem:[#allocation2 + $0x170] sm:$0xff]
        %v359 = vld [vmem:[#allocation2 + $0x178] sm:$0xff]
        %v360 = vld [vmem:[#allocation2 + $0x180] sm:$0xff]
        %v361 = vld [vmem:[#allocation2 + $0x188] sm:$0xff]
        %v362 = vld [vmem:[#allocation2 + $0x190] sm:$0xff]
        %v363 = vld [vmem:[#allocation2 + $0x198] sm:$0xff]
        %v364 = vld [vmem:[#allocation2 + $0x1a0] sm:$0xff]
        %v365 = vld [vmem:[#allocation2 + $0x1a8] sm:$0xff]
        %v366 = vld [vmem:[#allocation2 + $0x1b0] sm:$0xff]
        %v367 = vld [vmem:[#allocation2 + $0x1b8] sm:$0xff]
        %v368 = vld [vmem:[#allocation2 + $0x1c0] sm:$0xff]
        %v369 = vld [vmem:[#allocation2 + $0x1c8] sm:$0xff]
        %v370 = vld [vmem:[#allocation2 + $0x1d0] sm:$0xff]
        %v371 = vld [vmem:[#allocation2 + $0x1d8] sm:$0xff]
        %v372 = vld [vmem:[#allocation2 + $0x1e0] sm:$0xff]
        %v373 = vld [vmem:[#allocation2 + $0x1e8] sm:$0xff]
        %v374 = vld [vmem:[#allocation2 + $0x1f0] sm:$0xff]
        %v375 = vld [vmem:[#allocation2 + $0x1f8] sm:$0xff]
        %v376 = vld [vmem:[%s208] sm:$0xff]
        %v377 = vld [vmem:[%s208 + $0x8] sm:$0xff]
        %v378 = vld [vmem:[%s208 + $0x10] sm:$0xff]
        %v379 = vld [vmem:[%s208 + $0x18] sm:$0xff]
        %v380 = vld [vmem:[%s208 + $0x20] sm:$0xff]
        %v381 = vld [vmem:[%s208 + $0x28] sm:$0xff]
        %v382 = vld [vmem:[%s208 + $0x30] sm:$0xff]
        %v383 = vld [vmem:[%s208 + $0x38] sm:$0xff]
        %v384 = vld [vmem:[%s208 + $0x40] sm:$0xff]
        %v385 = vld [vmem:[%s208 + $0x48] sm:$0xff]
        %v386 = vld [vmem:[%s208 + $0x50] sm:$0xff]
        %v387 = vld [vmem:[%s208 + $0x58] sm:$0xff]
        %v388 = vld [vmem:[%s208 + $0x60] sm:$0xff]
        %v389 = vld [vmem:[%s208 + $0x68] sm:$0xff]
        %v390 = vld [vmem:[%s208 + $0x70] sm:$0xff]
        %v391 = vld [vmem:[%s208 + $0x78] sm:$0xff]
        %v392 = vld [vmem:[%s208 + $0x80] sm:$0xff]
        %v393 = vld [vmem:[%s208 + $0x88] sm:$0xff]
        %v394 = vld [vmem:[%s208 + $0x90] sm:$0xff]
        %v395 = vld [vmem:[%s208 + $0x98] sm:$0xff]
        %v396 = vld [vmem:[%s208 + $0xa0] sm:$0xff]
        %v397 = vld [vmem:[%s208 + $0xa8] sm:$0xff]
        %v398 = vld [vmem:[%s208 + $0xb0] sm:$0xff]
        %v399 = vld [vmem:[%s208 + $0xb8] sm:$0xff]
        %v400 = vld [vmem:[%s208 + $0xc0] sm:$0xff]
        %v401 = vld [vmem:[%s208 + $0xc8] sm:$0xff]
        %v402 = vld [vmem:[%s208 + $0xd0] sm:$0xff]
        %v403 = vld [vmem:[%s208 + $0xd8] sm:$0xff]
        %v404 = vld [vmem:[%s208 + $0xe0] sm:$0xff]
        %v405 = vld [vmem:[%s208 + $0xe8] sm:$0xff]
        %v406 = vld [vmem:[%s208 + $0xf0] sm:$0xff]
        %v407 = vld [vmem:[%s208 + $0xf8] sm:$0xff]
        %v408 = vld [vmem:[%s217] sm:$0xff]
        %v409 = vld [vmem:[%s217 + $0x8] sm:$0xff]
        %v410 = vld [vmem:[%s217 + $0x10] sm:$0xff]
        %v411 = vld [vmem:[%s217 + $0x18] sm:$0xff]
        %v412 = vld [vmem:[%s217 + $0x20] sm:$0xff]
        %v413 = vld [vmem:[%s217 + $0x28] sm:$0xff]
        %v414 = vld [vmem:[%s217 + $0x30] sm:$0xff]
        %v415 = vld [vmem:[%s217 + $0x38] sm:$0xff]
        %v416 = vld [vmem:[%s217 + $0x40] sm:$0xff]
        %v417 = vld [vmem:[%s217 + $0x48] sm:$0xff]
        %v418 = vld [vmem:[%s217 + $0x50] sm:$0xff]
        %v419 = vld [vmem:[%s217 + $0x58] sm:$0xff]
        %v420 = vld [vmem:[%s217 + $0x60] sm:$0xff]
        %v421 = vld [vmem:[%s217 + $0x68] sm:$0xff]
        %v422 = vld [vmem:[%s217 + $0x70] sm:$0xff]
        %v423 = vld [vmem:[%s217 + $0x78] sm:$0xff]
        %v424 = vld [vmem:[%s217 + $0x80] sm:$0xff]
        %v425 = vld [vmem:[%s217 + $0x88] sm:$0xff]
        %v426 = vld [vmem:[%s217 + $0x90] sm:$0xff]
        %v427 = vld [vmem:[%s217 + $0x98] sm:$0xff]
        %v428 = vld [vmem:[%s217 + $0xa0] sm:$0xff]
        %v429 = vld [vmem:[%s217 + $0xa8] sm:$0xff]
        %v430 = vld [vmem:[%s217 + $0xb0] sm:$0xff]
        %v431 = vld [vmem:[%s217 + $0xb8] sm:$0xff]
        %v432 = vld [vmem:[%s217 + $0xc0] sm:$0xff]
        %v433 = vld [vmem:[%s217 + $0xc8] sm:$0xff]
        %v434 = vld [vmem:[%s217 + $0xd0] sm:$0xff]
        %v435 = vld [vmem:[%s217 + $0xd8] sm:$0xff]
        %v436 = vld [vmem:[%s217 + $0xe0] sm:$0xff]
        %v437 = vld [vmem:[%s217 + $0xe8] sm:$0xff]
        %v438 = vld [vmem:[%s217 + $0xf0] sm:$0xff]
        %v439 = vld [vmem:[%s217 + $0xf8] sm:$0xff]
        %v440 = vld [vmem:[%s217 + $0x100] sm:$0xff]
        %v441 = vld [vmem:[%s217 + $0x108] sm:$0xff]
        %v442 = vld [vmem:[%s217 + $0x110] sm:$0xff]
        %v443 = vld [vmem:[%s217 + $0x118] sm:$0xff]
        %v444 = vld [vmem:[%s217 + $0x120] sm:$0xff]
        %v445 = vld [vmem:[%s217 + $0x128] sm:$0xff]
        %v446 = vld [vmem:[%s217 + $0x130] sm:$0xff]
        %v447 = vld [vmem:[%s217 + $0x138] sm:$0xff]
        %v448 = vld [vmem:[%s217 + $0x140] sm:$0xff]
        %v449 = vld [vmem:[%s217 + $0x148] sm:$0xff]
        %v450 = vld [vmem:[%s217 + $0x150] sm:$0xff]
        %v451 = vld [vmem:[%s217 + $0x158] sm:$0xff]
        %v452 = vld [vmem:[%s217 + $0x160] sm:$0xff]
        %v453 = vld [vmem:[%s217 + $0x168] sm:$0xff]
        %v454 = vld [vmem:[%s217 + $0x170] sm:$0xff]
        %v455 = vld [vmem:[%s217 + $0x178] sm:$0xff]
        %v456 = vld [vmem:[%s217 + $0x180] sm:$0xff]
        %v457 = vld [vmem:[%s217 + $0x188] sm:$0xff]
        %v458 = vld [vmem:[%s217 + $0x190] sm:$0xff]
        %v459 = vld [vmem:[%s217 + $0x198] sm:$0xff]
        %v460 = vld [vmem:[%s217 + $0x1a0] sm:$0xff]
        %v461 = vld [vmem:[%s217 + $0x1a8] sm:$0xff]
        %v462 = vld [vmem:[%s217 + $0x1b0] sm:$0xff]
        %v463 = vld [vmem:[%s217 + $0x1b8] sm:$0xff]
        %v464 = vld [vmem:[%s217 + $0x1c0] sm:$0xff]
        %v465 = vld [vmem:[%s217 + $0x1c8] sm:$0xff]
        %v466 = vld [vmem:[%s217 + $0x1d0] sm:$0xff]
        %v467 = vld [vmem:[%s217 + $0x1d8] sm:$0xff]
        %v468 = vld [vmem:[%s217 + $0x1e0] sm:$0xff]
        %v469 = vld [vmem:[%s217 + $0x1e8] sm:$0xff]
        %v470 = vld [vmem:[%s217 + $0x1f0] sm:$0xff]
        %v471 = vld [vmem:[%s217 + $0x1f8] sm:$0xff]
        %v472 = vld [vmem:[%s217 + $0x200] sm:$0xff]
        %v473 = vld [vmem:[%s217 + $0x208] sm:$0xff]
        %v474 = vld [vmem:[%s217 + $0x210] sm:$0xff]
        %v475 = vld [vmem:[%s217 + $0x218] sm:$0xff]
        %v476 = vld [vmem:[%s217 + $0x220] sm:$0xff]
        %v477 = vld [vmem:[%s217 + $0x228] sm:$0xff]
        %v478 = vld [vmem:[%s217 + $0x230] sm:$0xff]
        %v479 = vld [vmem:[%s217 + $0x238] sm:$0xff]
        %v480 = vld [vmem:[%s217 + $0x240] sm:$0xff]
        %v481 = vld [vmem:[%s217 + $0x248] sm:$0xff]
        %v482 = vld [vmem:[%s217 + $0x250] sm:$0xff]
        %v483 = vld [vmem:[%s217 + $0x258] sm:$0xff]
        %v484 = vld [vmem:[%s217 + $0x260] sm:$0xff]
        %v485 = vld [vmem:[%s217 + $0x268] sm:$0xff]
        %v486 = vld [vmem:[%s217 + $0x270] sm:$0xff]
        %v487 = vld [vmem:[%s217 + $0x278] sm:$0xff]
        %v488 = vld [vmem:[%s217 + $0x280] sm:$0xff]
        %v489 = vld [vmem:[%s217 + $0x288] sm:$0xff]
        %v490 = vld [vmem:[%s217 + $0x290] sm:$0xff]
        %v491 = vld [vmem:[%s217 + $0x298] sm:$0xff]
        %v492 = vld [vmem:[%s217 + $0x2a0] sm:$0xff]
        %v493 = vld [vmem:[%s217 + $0x2a8] sm:$0xff]
        %v494 = vld [vmem:[%s217 + $0x2b0] sm:$0xff]
        %v495 = vld [vmem:[%s217 + $0x2b8] sm:$0xff]
        %v496 = vld [vmem:[%s217 + $0x2c0] sm:$0xff]
        %v497 = vld [vmem:[%s217 + $0x2c8] sm:$0xff]
        %v498 = vld [vmem:[%s217 + $0x2d0] sm:$0xff]
        %v499 = vld [vmem:[%s217 + $0x2d8] sm:$0xff]
        %v500 = vld [vmem:[%s217 + $0x2e0] sm:$0xff]
        %v501 = vld [vmem:[%s217 + $0x2e8] sm:$0xff]
        %v502 = vld [vmem:[%s217 + $0x2f0] sm:$0xff]
        %v503 = vld [vmem:[%s217 + $0x2f8] sm:$0xff]
        %v504 = vld [vmem:[%s217 + $0x300] sm:$0xff]
        %v505 = vld [vmem:[%s217 + $0x308] sm:$0xff]
        %v506 = vld [vmem:[%s217 + $0x310] sm:$0xff]
        %v507 = vld [vmem:[%s217 + $0x318] sm:$0xff]
        %v508 = vld [vmem:[%s217 + $0x320] sm:$0xff]
        %v509 = vld [vmem:[%s217 + $0x328] sm:$0xff]
        %v510 = vld [vmem:[%s217 + $0x330] sm:$0xff]
        %v511 = vld [vmem:[%s217 + $0x338] sm:$0xff]
        %v512 = vld [vmem:[%s217 + $0x340] sm:$0xff]
        %v513 = vld [vmem:[%s217 + $0x348] sm:$0xff]
        %v514 = vld [vmem:[%s217 + $0x350] sm:$0xff]
        %v515 = vld [vmem:[%s217 + $0x358] sm:$0xff]
        %v516 = vld [vmem:[%s217 + $0x360] sm:$0xff]
        %v517 = vld [vmem:[%s217 + $0x368] sm:$0xff]
        %v518 = vld [vmem:[%s217 + $0x370] sm:$0xff]
        %v519 = vld [vmem:[%s217 + $0x378] sm:$0xff]
        %v520 = vld [vmem:[%s217 + $0x380] sm:$0xff]
        %v521 = vld [vmem:[%s217 + $0x388] sm:$0xff]
        %v522 = vld [vmem:[%s217 + $0x390] sm:$0xff]
        %v523 = vld [vmem:[%s217 + $0x398] sm:$0xff]
        %v524 = vld [vmem:[%s217 + $0x3a0] sm:$0xff]
        %v525 = vld [vmem:[%s217 + $0x3a8] sm:$0xff]
        %v526 = vld [vmem:[%s217 + $0x3b0] sm:$0xff]
        %v527 = vld [vmem:[%s217 + $0x3b8] sm:$0xff]
        %v528 = vld [vmem:[%s217 + $0x3c0] sm:$0xff]
        %v529 = vld [vmem:[%s217 + $0x3c8] sm:$0xff]
        %v530 = vld [vmem:[%s217 + $0x3d0] sm:$0xff]
        %v531 = vld [vmem:[%s217 + $0x3d8] sm:$0xff]
        %v532 = vld [vmem:[%s217 + $0x3e0] sm:$0xff]
        %v533 = vld [vmem:[%s217 + $0x3e8] sm:$0xff]
        %v534 = vld [vmem:[%s217 + $0x3f0] sm:$0xff]
        %v535 = vld [vmem:[%s217 + $0x3f8] sm:$0xff]
        %v568 = vunpack.c.l.b16 %v376
        %v569 = vunpack.c.h.b16 %v376
        %v570 = vunpack.c.l.b16 %v377
        %v571 = vunpack.c.h.b16 %v377
        %v572 = vunpack.c.l.b16 %v378
        %v573 = vunpack.c.h.b16 %v378
        %v574 = vunpack.c.l.b16 %v379
        %v575 = vunpack.c.h.b16 %v379
        %v576 = vunpack.c.l.b16 %v380
        %v577 = vunpack.c.h.b16 %v380
        %v578 = vunpack.c.l.b16 %v381
        %v579 = vunpack.c.h.b16 %v381
        %v580 = vunpack.c.l.b16 %v382
        %v581 = vunpack.c.h.b16 %v382
        %v582 = vunpack.c.l.b16 %v383
        %v583 = vunpack.c.h.b16 %v383
        %v584 = vunpack.c.l.b16 %v384
        %v585 = vunpack.c.h.b16 %v384
        %v586 = vunpack.c.l.b16 %v385
        %v587 = vunpack.c.h.b16 %v385
        %v588 = vunpack.c.l.b16 %v386
        %v589 = vunpack.c.h.b16 %v386
        %v590 = vunpack.c.l.b16 %v387
        %v591 = vunpack.c.h.b16 %v387
        %v592 = vunpack.c.l.b16 %v388
        %v593 = vunpack.c.h.b16 %v388
        %v594 = vunpack.c.l.b16 %v389
        %v595 = vunpack.c.h.b16 %v389
        %v596 = vunpack.c.l.b16 %v390
        %v597 = vunpack.c.h.b16 %v390
        %v598 = vunpack.c.l.b16 %v391
        %v599 = vunpack.c.h.b16 %v391
        %v600 = vunpack.c.l.b16 %v392
        %v601 = vunpack.c.h.b16 %v392
        %v602 = vunpack.c.l.b16 %v393
        %v603 = vunpack.c.h.b16 %v393
        %v604 = vunpack.c.l.b16 %v394
        %v605 = vunpack.c.h.b16 %v394
        %v606 = vunpack.c.l.b16 %v395
        %v607 = vunpack.c.h.b16 %v395
        %v608 = vunpack.c.l.b16 %v396
        %v609 = vunpack.c.h.b16 %v396
        %v610 = vunpack.c.l.b16 %v397
        %v611 = vunpack.c.h.b16 %v397
        %v612 = vunpack.c.l.b16 %v398
        %v613 = vunpack.c.h.b16 %v398
        %v614 = vunpack.c.l.b16 %v399
        %v615 = vunpack.c.h.b16 %v399
        %v616 = vunpack.c.l.b16 %v400
        %v617 = vunpack.c.h.b16 %v400
        %v618 = vunpack.c.l.b16 %v401
        %v619 = vunpack.c.h.b16 %v401
        %v620 = vunpack.c.l.b16 %v402
        %v621 = vunpack.c.h.b16 %v402
        %v622 = vunpack.c.l.b16 %v403
        %v623 = vunpack.c.h.b16 %v403
        %v624 = vunpack.c.l.b16 %v404
        %v625 = vunpack.c.h.b16 %v404
        %v626 = vunpack.c.l.b16 %v405
        %v627 = vunpack.c.h.b16 %v405
        %v628 = vunpack.c.l.b16 %v406
        %v629 = vunpack.c.h.b16 %v406
        %v630 = vunpack.c.l.b16 %v407
        %v631 = vunpack.c.h.b16 %v407
        %v632 = vpack.c.b16 %v572, %v568
        %v633 = vpack.c.b16 %v573, %v569
        %v634 = vpack.c.b16 %v574, %v570
        %v635 = vpack.c.b16 %v575, %v571
        %v636 = vpack.c.b16 %v580, %v576
        %v637 = vpack.c.b16 %v581, %v577
        %v638 = vpack.c.b16 %v582, %v578
        %v639 = vpack.c.b16 %v583, %v579
        %v640 = vpack.c.b16 %v588, %v584
        %v641 = vpack.c.b16 %v589, %v585
        %v642 = vpack.c.b16 %v590, %v586
        %v643 = vpack.c.b16 %v591, %v587
        %v644 = vpack.c.b16 %v596, %v592
        %v645 = vpack.c.b16 %v597, %v593
        %v646 = vpack.c.b16 %v598, %v594
        %v647 = vpack.c.b16 %v599, %v595
        %v648 = vpack.c.b16 %v604, %v600
        %v649 = vpack.c.b16 %v605, %v601
        %v650 = vpack.c.b16 %v606, %v602
        %v651 = vpack.c.b16 %v607, %v603
        %v652 = vpack.c.b16 %v612, %v608
        %v653 = vpack.c.b16 %v613, %v609
        %v654 = vpack.c.b16 %v614, %v610
        %v655 = vpack.c.b16 %v615, %v611
        %v656 = vpack.c.b16 %v620, %v616
        %v657 = vpack.c.b16 %v621, %v617
        %v658 = vpack.c.b16 %v622, %v618
        %v659 = vpack.c.b16 %v623, %v619
        %v660 = vpack.c.b16 %v628, %v624
        %v661 = vpack.c.b16 %v629, %v625
        %v662 = vpack.c.b16 %v630, %v626
        %v663 = vpack.c.b16 %v631, %v627
        %v824 = vunpack.c.l.b16 %v408
        %v825 = vunpack.c.h.b16 %v408
        %v826 = vunpack.c.l.b16 %v409
        %v827 = vunpack.c.h.b16 %v409
        %v828 = vunpack.c.l.b16 %v410
        %v829 = vunpack.c.h.b16 %v410
        %v830 = vunpack.c.l.b16 %v411
        %v831 = vunpack.c.h.b16 %v411
        %v832 = vunpack.c.l.b16 %v412
        %v833 = vunpack.c.h.b16 %v412
        %v834 = vunpack.c.l.b16 %v413
        %v835 = vunpack.c.h.b16 %v413
        %v836 = vunpack.c.l.b16 %v414
        %v837 = vunpack.c.h.b16 %v414
        %v838 = vunpack.c.l.b16 %v415
        %v839 = vunpack.c.h.b16 %v415
        %v840 = vunpack.c.l.b16 %v416
        %v841 = vunpack.c.h.b16 %v416
        %v842 = vunpack.c.l.b16 %v417
        %v843 = vunpack.c.h.b16 %v417
        %v844 = vunpack.c.l.b16 %v418
        %v845 = vunpack.c.h.b16 %v418
        %v846 = vunpack.c.l.b16 %v419
        %v847 = vunpack.c.h.b16 %v419
        %v848 = vunpack.c.l.b16 %v420
        %v849 = vunpack.c.h.b16 %v420
        %v850 = vunpack.c.l.b16 %v421
        %v851 = vunpack.c.h.b16 %v421
        %v852 = vunpack.c.l.b16 %v422
        %v853 = vunpack.c.h.b16 %v422
        %v854 = vunpack.c.l.b16 %v423
        %v855 = vunpack.c.h.b16 %v423
        %v856 = vunpack.c.l.b16 %v424
        %v857 = vunpack.c.h.b16 %v424
        %v858 = vunpack.c.l.b16 %v425
        %v859 = vunpack.c.h.b16 %v425
        %v860 = vunpack.c.l.b16 %v426
        %v861 = vunpack.c.h.b16 %v426
        %v862 = vunpack.c.l.b16 %v427
        %v863 = vunpack.c.h.b16 %v427
        %v864 = vunpack.c.l.b16 %v428
        %v865 = vunpack.c.h.b16 %v428
        %v866 = vunpack.c.l.b16 %v429
        %v867 = vunpack.c.h.b16 %v429
        %v868 = vunpack.c.l.b16 %v430
        %v869 = vunpack.c.h.b16 %v430
        %v870 = vunpack.c.l.b16 %v431
        %v871 = vunpack.c.h.b16 %v431
        %v872 = vunpack.c.l.b16 %v432
        %v873 = vunpack.c.h.b16 %v432
        %v874 = vunpack.c.l.b16 %v433
        %v875 = vunpack.c.h.b16 %v433
        %v876 = vunpack.c.l.b16 %v434
        %v877 = vunpack.c.h.b16 %v434
        %v878 = vunpack.c.l.b16 %v435
        %v879 = vunpack.c.h.b16 %v435
        %v880 = vunpack.c.l.b16 %v436
        %v881 = vunpack.c.h.b16 %v436
        %v882 = vunpack.c.l.b16 %v437
        %v883 = vunpack.c.h.b16 %v437
        %v884 = vunpack.c.l.b16 %v438
        %v885 = vunpack.c.h.b16 %v438
        %v886 = vunpack.c.l.b16 %v439
        %v887 = vunpack.c.h.b16 %v439
        %v888 = vunpack.c.l.b16 %v440
        %v889 = vunpack.c.h.b16 %v440
        %v890 = vunpack.c.l.b16 %v441
        %v891 = vunpack.c.h.b16 %v441
        %v892 = vunpack.c.l.b16 %v442
        %v893 = vunpack.c.h.b16 %v442
        %v894 = vunpack.c.l.b16 %v443
        %v895 = vunpack.c.h.b16 %v443
        %v896 = vunpack.c.l.b16 %v444
        %v897 = vunpack.c.h.b16 %v444
        %v898 = vunpack.c.l.b16 %v445
        %v899 = vunpack.c.h.b16 %v445
        %v900 = vunpack.c.l.b16 %v446
        %v901 = vunpack.c.h.b16 %v446
        %v902 = vunpack.c.l.b16 %v447
        %v903 = vunpack.c.h.b16 %v447
        %v904 = vunpack.c.l.b16 %v448
        %v905 = vunpack.c.h.b16 %v448
        %v906 = vunpack.c.l.b16 %v449
        %v907 = vunpack.c.h.b16 %v449
        %v908 = vunpack.c.l.b16 %v450
        %v909 = vunpack.c.h.b16 %v450
        %v910 = vunpack.c.l.b16 %v451
        %v911 = vunpack.c.h.b16 %v451
        %v912 = vunpack.c.l.b16 %v452
        %v913 = vunpack.c.h.b16 %v452
        %v914 = vunpack.c.l.b16 %v453
        %v915 = vunpack.c.h.b16 %v453
        %v916 = vunpack.c.l.b16 %v454
        %v917 = vunpack.c.h.b16 %v454
        %v918 = vunpack.c.l.b16 %v455
        %v919 = vunpack.c.h.b16 %v455
        %v920 = vunpack.c.l.b16 %v456
        %v921 = vunpack.c.h.b16 %v456
        %v922 = vunpack.c.l.b16 %v457
        %v923 = vunpack.c.h.b16 %v457
        %v924 = vunpack.c.l.b16 %v458
        %v925 = vunpack.c.h.b16 %v458
        %v926 = vunpack.c.l.b16 %v459
        %v927 = vunpack.c.h.b16 %v459
        %v928 = vunpack.c.l.b16 %v460
        %v929 = vunpack.c.h.b16 %v460
        %v930 = vunpack.c.l.b16 %v461
        %v931 = vunpack.c.h.b16 %v461
        %v932 = vunpack.c.l.b16 %v462
        %v933 = vunpack.c.h.b16 %v462
        %v934 = vunpack.c.l.b16 %v463
        %v935 = vunpack.c.h.b16 %v463
        %v936 = vunpack.c.l.b16 %v464
        %v937 = vunpack.c.h.b16 %v464
        %v938 = vunpack.c.l.b16 %v465
        %v939 = vunpack.c.h.b16 %v465
        %v940 = vunpack.c.l.b16 %v466
        %v941 = vunpack.c.h.b16 %v466
        %v942 = vunpack.c.l.b16 %v467
        %v943 = vunpack.c.h.b16 %v467
        %v944 = vunpack.c.l.b16 %v468
        %v945 = vunpack.c.h.b16 %v468
        %v946 = vunpack.c.l.b16 %v469
        %v947 = vunpack.c.h.b16 %v469
        %v948 = vunpack.c.l.b16 %v470
        %v949 = vunpack.c.h.b16 %v470
        %v950 = vunpack.c.l.b16 %v471
        %v951 = vunpack.c.h.b16 %v471
        %v952 = vunpack.c.l.b16 %v472
        %v953 = vunpack.c.h.b16 %v472
        %v954 = vunpack.c.l.b16 %v473
        %v955 = vunpack.c.h.b16 %v473
        %v956 = vunpack.c.l.b16 %v474
        %v957 = vunpack.c.h.b16 %v474
        %v958 = vunpack.c.l.b16 %v475
        %v959 = vunpack.c.h.b16 %v475
        %v960 = vunpack.c.l.b16 %v476
        %v961 = vunpack.c.h.b16 %v476
        %v962 = vunpack.c.l.b16 %v477
        %v963 = vunpack.c.h.b16 %v477
        %v964 = vunpack.c.l.b16 %v478
        %v965 = vunpack.c.h.b16 %v478
        %v966 = vunpack.c.l.b16 %v479
        %v967 = vunpack.c.h.b16 %v479
        %v968 = vunpack.c.l.b16 %v480
        %v969 = vunpack.c.h.b16 %v480
        %v970 = vunpack.c.l.b16 %v481
        %v971 = vunpack.c.h.b16 %v481
        %v972 = vunpack.c.l.b16 %v482
        %v973 = vunpack.c.h.b16 %v482
        %v974 = vunpack.c.l.b16 %v483
        %v975 = vunpack.c.h.b16 %v483
        %v976 = vunpack.c.l.b16 %v484
        %v977 = vunpack.c.h.b16 %v484
        %v978 = vunpack.c.l.b16 %v485
        %v979 = vunpack.c.h.b16 %v485
        %v980 = vunpack.c.l.b16 %v486
        %v981 = vunpack.c.h.b16 %v486
        %v982 = vunpack.c.l.b16 %v487
        %v983 = vunpack.c.h.b16 %v487
        %v984 = vunpack.c.l.b16 %v488
        %v985 = vunpack.c.h.b16 %v488
        %v986 = vunpack.c.l.b16 %v489
        %v987 = vunpack.c.h.b16 %v489
        %v988 = vunpack.c.l.b16 %v490
        %v989 = vunpack.c.h.b16 %v490
        %v990 = vunpack.c.l.b16 %v491
        %v991 = vunpack.c.h.b16 %v491
        %v992 = vunpack.c.l.b16 %v492
        %v993 = vunpack.c.h.b16 %v492
        %v994 = vunpack.c.l.b16 %v493
        %v995 = vunpack.c.h.b16 %v493
        %v996 = vunpack.c.l.b16 %v494
        %v997 = vunpack.c.h.b16 %v494
        %v998 = vunpack.c.l.b16 %v495
        %v999 = vunpack.c.h.b16 %v495
        %v1000 = vunpack.c.l.b16 %v496
        %v1001 = vunpack.c.h.b16 %v496
        %v1002 = vunpack.c.l.b16 %v497
        %v1003 = vunpack.c.h.b16 %v497
        %v1004 = vunpack.c.l.b16 %v498
        %v1005 = vunpack.c.h.b16 %v498
        %v1006 = vunpack.c.l.b16 %v499
        %v1007 = vunpack.c.h.b16 %v499
        %v1008 = vunpack.c.l.b16 %v500
        %v1009 = vunpack.c.h.b16 %v500
        %v1010 = vunpack.c.l.b16 %v501
        %v1011 = vunpack.c.h.b16 %v501
        %v1012 = vunpack.c.l.b16 %v502
        %v1013 = vunpack.c.h.b16 %v502
        %v1014 = vunpack.c.l.b16 %v503
        %v1015 = vunpack.c.h.b16 %v503
        %v1016 = vunpack.c.l.b16 %v504
        %v1017 = vunpack.c.h.b16 %v504
        %v1018 = vunpack.c.l.b16 %v505
        %v1019 = vunpack.c.h.b16 %v505
        %v1020 = vunpack.c.l.b16 %v506
        %v1021 = vunpack.c.h.b16 %v506
        %v1022 = vunpack.c.l.b16 %v507
        %v1023 = vunpack.c.h.b16 %v507
        %v1024 = vunpack.c.l.b16 %v508
        %v1025 = vunpack.c.h.b16 %v508
        %v1026 = vunpack.c.l.b16 %v509
        %v1027 = vunpack.c.h.b16 %v509
        %v1028 = vunpack.c.l.b16 %v510
        %v1029 = vunpack.c.h.b16 %v510
        %v1030 = vunpack.c.l.b16 %v511
        %v1031 = vunpack.c.h.b16 %v511
        %v1032 = vunpack.c.l.b16 %v512
        %v1033 = vunpack.c.h.b16 %v512
        %v1034 = vunpack.c.l.b16 %v513
        %v1035 = vunpack.c.h.b16 %v513
        %v1036 = vunpack.c.l.b16 %v514
        %v1037 = vunpack.c.h.b16 %v514
        %v1038 = vunpack.c.l.b16 %v515
        %v1039 = vunpack.c.h.b16 %v515
        %v1040 = vunpack.c.l.b16 %v516
        %v1041 = vunpack.c.h.b16 %v516
        %v1042 = vunpack.c.l.b16 %v517
        %v1043 = vunpack.c.h.b16 %v517
        %v1044 = vunpack.c.l.b16 %v518
        %v1045 = vunpack.c.h.b16 %v518
        %v1046 = vunpack.c.l.b16 %v519
        %v1047 = vunpack.c.h.b16 %v519
        %v1048 = vunpack.c.l.b16 %v520
        %v1049 = vunpack.c.h.b16 %v520
        %v1050 = vunpack.c.l.b16 %v521
        %v1051 = vunpack.c.h.b16 %v521
        %v1052 = vunpack.c.l.b16 %v522
        %v1053 = vunpack.c.h.b16 %v522
        %v1054 = vunpack.c.l.b16 %v523
        %v1055 = vunpack.c.h.b16 %v523
        %v1056 = vunpack.c.l.b16 %v524
        %v1057 = vunpack.c.h.b16 %v524
        %v1058 = vunpack.c.l.b16 %v525
        %v1059 = vunpack.c.h.b16 %v525
        %v1060 = vunpack.c.l.b16 %v526
        %v1061 = vunpack.c.h.b16 %v526
        %v1062 = vunpack.c.l.b16 %v527
        %v1063 = vunpack.c.h.b16 %v527
        %v1064 = vunpack.c.l.b16 %v528
        %v1065 = vunpack.c.h.b16 %v528
        %v1066 = vunpack.c.l.b16 %v529
        %v1067 = vunpack.c.h.b16 %v529
        %v1068 = vunpack.c.l.b16 %v530
        %v1069 = vunpack.c.h.b16 %v530
        %v1070 = vunpack.c.l.b16 %v531
        %v1071 = vunpack.c.h.b16 %v531
        %v1072 = vunpack.c.l.b16 %v532
        %v1073 = vunpack.c.h.b16 %v532
        %v1074 = vunpack.c.l.b16 %v533
        %v1075 = vunpack.c.h.b16 %v533
        %v1076 = vunpack.c.l.b16 %v534
        %v1077 = vunpack.c.h.b16 %v534
        %v1078 = vunpack.c.l.b16 %v535
        %v1079 = vunpack.c.h.b16 %v535
        %v1080 = vpack.c.b16 %v828, %v824
        %v1081 = vpack.c.b16 %v829, %v825
        %v1082 = vpack.c.b16 %v830, %v826
        %v1083 = vpack.c.b16 %v831, %v827
        %v1084 = vpack.c.b16 %v836, %v832
        %v1085 = vpack.c.b16 %v837, %v833
        %v1086 = vpack.c.b16 %v838, %v834
        %v1087 = vpack.c.b16 %v839, %v835
        %v1088 = vpack.c.b16 %v844, %v840
        %v1089 = vpack.c.b16 %v845, %v841
        %v1090 = vpack.c.b16 %v846, %v842
        %v1091 = vpack.c.b16 %v847, %v843
        %v1092 = vpack.c.b16 %v852, %v848
        %v1093 = vpack.c.b16 %v853, %v849
        %v1094 = vpack.c.b16 %v854, %v850
        %v1095 = vpack.c.b16 %v855, %v851
        %v1096 = vpack.c.b16 %v860, %v856
        %v1097 = vpack.c.b16 %v861, %v857
        %v1098 = vpack.c.b16 %v862, %v858
        %v1099 = vpack.c.b16 %v863, %v859
        %v1100 = vpack.c.b16 %v868, %v864
        %v1101 = vpack.c.b16 %v869, %v865
        %v1102 = vpack.c.b16 %v870, %v866
        %v1103 = vpack.c.b16 %v871, %v867
        %v1104 = vpack.c.b16 %v876, %v872
        %v1105 = vpack.c.b16 %v877, %v873
        %v1106 = vpack.c.b16 %v878, %v874
        %v1107 = vpack.c.b16 %v879, %v875
        %v1108 = vpack.c.b16 %v884, %v880
        %v1109 = vpack.c.b16 %v885, %v881
        %v1110 = vpack.c.b16 %v886, %v882
        %v1111 = vpack.c.b16 %v887, %v883
        %v1112 = vpack.c.b16 %v892, %v888
        %v1113 = vpack.c.b16 %v893, %v889
        %v1114 = vpack.c.b16 %v894, %v890
        %v1115 = vpack.c.b16 %v895, %v891
        %v1116 = vpack.c.b16 %v900, %v896
        %v1117 = vpack.c.b16 %v901, %v897
        %v1118 = vpack.c.b16 %v902, %v898
        %v1119 = vpack.c.b16 %v903, %v899
        %v1120 = vpack.c.b16 %v908, %v904
        %v1121 = vpack.c.b16 %v909, %v905
        %v1122 = vpack.c.b16 %v910, %v906
        %v1123 = vpack.c.b16 %v911, %v907
        %v1124 = vpack.c.b16 %v916, %v912
        %v1125 = vpack.c.b16 %v917, %v913
        %v1126 = vpack.c.b16 %v918, %v914
        %v1127 = vpack.c.b16 %v919, %v915
        %v1128 = vpack.c.b16 %v924, %v920
        %v1129 = vpack.c.b16 %v925, %v921
        %v1130 = vpack.c.b16 %v926, %v922
        %v1131 = vpack.c.b16 %v927, %v923
        %v1132 = vpack.c.b16 %v932, %v928
        %v1133 = vpack.c.b16 %v933, %v929
        %v1134 = vpack.c.b16 %v934, %v930
        %v1135 = vpack.c.b16 %v935, %v931
        %v1136 = vpack.c.b16 %v940, %v936
        %v1137 = vpack.c.b16 %v941, %v937
        %v1138 = vpack.c.b16 %v942, %v938
        %v1139 = vpack.c.b16 %v943, %v939
        %v1140 = vpack.c.b16 %v948, %v944
        %v1141 = vpack.c.b16 %v949, %v945
        %v1142 = vpack.c.b16 %v950, %v946
        %v1143 = vpack.c.b16 %v951, %v947
        %v1144 = vpack.c.b16 %v956, %v952
        %v1145 = vpack.c.b16 %v957, %v953
        %v1146 = vpack.c.b16 %v958, %v954
        %v1147 = vpack.c.b16 %v959, %v955
        %v1148 = vpack.c.b16 %v964, %v960
        %v1149 = vpack.c.b16 %v965, %v961
        %v1150 = vpack.c.b16 %v966, %v962
        %v1151 = vpack.c.b16 %v967, %v963
        %v1152 = vpack.c.b16 %v972, %v968
        %v1153 = vpack.c.b16 %v973, %v969
        %v1154 = vpack.c.b16 %v974, %v970
        %v1155 = vpack.c.b16 %v975, %v971
        %v1156 = vpack.c.b16 %v980, %v976
        %v1157 = vpack.c.b16 %v981, %v977
        %v1158 = vpack.c.b16 %v982, %v978
        %v1159 = vpack.c.b16 %v983, %v979
        %v1160 = vpack.c.b16 %v988, %v984
        %v1161 = vpack.c.b16 %v989, %v985
        %v1162 = vpack.c.b16 %v990, %v986
        %v1163 = vpack.c.b16 %v991, %v987
        %v1164 = vpack.c.b16 %v996, %v992
        %v1165 = vpack.c.b16 %v997, %v993
        %v1166 = vpack.c.b16 %v998, %v994
        %v1167 = vpack.c.b16 %v999, %v995
        %v1168 = vpack.c.b16 %v1004, %v1000
        %v1169 = vpack.c.b16 %v1005, %v1001
        %v1170 = vpack.c.b16 %v1006, %v1002
        %v1171 = vpack.c.b16 %v1007, %v1003
        %v1172 = vpack.c.b16 %v1012, %v1008
        %v1173 = vpack.c.b16 %v1013, %v1009
        %v1174 = vpack.c.b16 %v1014, %v1010
        %v1175 = vpack.c.b16 %v1015, %v1011
        %v1176 = vpack.c.b16 %v1020, %v1016
        %v1177 = vpack.c.b16 %v1021, %v1017
        %v1178 = vpack.c.b16 %v1022, %v1018
        %v1179 = vpack.c.b16 %v1023, %v1019
        %v1180 = vpack.c.b16 %v1028, %v1024
        %v1181 = vpack.c.b16 %v1029, %v1025
        %v1182 = vpack.c.b16 %v1030, %v1026
        %v1183 = vpack.c.b16 %v1031, %v1027
        %v1184 = vpack.c.b16 %v1036, %v1032
        %v1185 = vpack.c.b16 %v1037, %v1033
        %v1186 = vpack.c.b16 %v1038, %v1034
        %v1187 = vpack.c.b16 %v1039, %v1035
        %v1188 = vpack.c.b16 %v1044, %v1040
        %v1189 = vpack.c.b16 %v1045, %v1041
        %v1190 = vpack.c.b16 %v1046, %v1042
        %v1191 = vpack.c.b16 %v1047, %v1043
        %v1192 = vpack.c.b16 %v1052, %v1048
        %v1193 = vpack.c.b16 %v1053, %v1049
        %v1194 = vpack.c.b16 %v1054, %v1050
        %v1195 = vpack.c.b16 %v1055, %v1051
        %v1196 = vpack.c.b16 %v1060, %v1056
        %v1197 = vpack.c.b16 %v1061, %v1057
        %v1198 = vpack.c.b16 %v1062, %v1058
        %v1199 = vpack.c.b16 %v1063, %v1059
        %v1200 = vpack.c.b16 %v1068, %v1064
        %v1201 = vpack.c.b16 %v1069, %v1065
        %v1202 = vpack.c.b16 %v1070, %v1066
        %v1203 = vpack.c.b16 %v1071, %v1067
        %v1204 = vpack.c.b16 %v1076, %v1072
        %v1205 = vpack.c.b16 %v1077, %v1073
        %v1206 = vpack.c.b16 %v1078, %v1074
        %v1207 = vpack.c.b16 %v1079, %v1075
        %1336 = vmatprep.subr.bf16.mxu0 %v1081
        %1337 = vmatpush1.bf16.msra.mxu0 %v1080
        %1338 = vmatprep.subr.bf16.mxu0 %v1085
        %1339 = vmatpush1.bf16.msra.mxu0 %v1084
        %1340 = vmatprep.subr.bf16.mxu0 %v1089
        %1341 = vmatpush1.bf16.msra.mxu0 %v1088
        %1342 = vmatprep.subr.bf16.mxu0 %v1093
        %1343 = vmatpush1.bf16.msra.mxu0 %v1092
        %1344 = vmatprep.subr.bf16.mxu0 %v1097
        %1345 = vmatpush1.bf16.msra.mxu0 %v1096
        %1346 = vmatprep.subr.bf16.mxu0 %v1101
        %1347 = vmatpush1.bf16.msra.mxu0 %v1100
        %1348 = vmatprep.subr.bf16.mxu0 %v1105
        %1349 = vmatpush1.bf16.msra.mxu0 %v1104
        %1350 = vmatprep.subr.bf16.mxu0 %v1109
        %1351 = vmatpush1.bf16.msra.mxu0 %v1108
        %1352 = vmatprep.subr.bf16.mxu0 %v1113
        %1353 = vmatpush1.bf16.msra.mxu0 %v1112
        %1354 = vmatprep.subr.bf16.mxu0 %v1117
        %1355 = vmatpush1.bf16.msra.mxu0 %v1116
        %1356 = vmatprep.subr.bf16.mxu0 %v1121
        %1357 = vmatpush1.bf16.msra.mxu0 %v1120
        %1358 = vmatprep.subr.bf16.mxu0 %v1125
        %1359 = vmatpush1.bf16.msra.mxu0 %v1124
        %1360 = vmatprep.subr.bf16.mxu0 %v1129
        %1361 = vmatpush1.bf16.msra.mxu0 %v1128
        %1362 = vmatprep.subr.bf16.mxu0 %v1133
        %1363 = vmatpush1.bf16.msra.mxu0 %v1132
        %1364 = vmatprep.subr.bf16.mxu0 %v1137
        %1365 = vmatpush1.bf16.msra.mxu0 %v1136
        %1366 = vmatprep.subr.bf16.mxu0 %v1141
        %1367 = vmatpush1.bf16.msra.mxu0 %v1140
        %1368 = vmatprep.mubr.bf16.mxu0 %v633
        %1369 = vmatmul.mubr.bf16.gmra.mrb[0].mxu0 %v632
        %v1370 = vpop.f32.mrb[0].mxu0
        %v1371 = vadd.f32 0.0, %v1370
        %v1372 = vpop.f32.mrb[0].mxu0
        %v1373 = vadd.f32 0.0, %v1372
        %v1374 = vpop.f32.mrb[0].mxu0
        %v1375 = vadd.f32 0.0, %v1374
        %v1376 = vpop.f32.mrb[0].mxu0
        %v1377 = vadd.f32 0.0, %v1376
        %1378 = vmatprep.mubr.bf16.mxu0 %v637
        %1379 = vmatmul.mubr.bf16.gmra.mrb[0].mxu0 %v636
        %v1380 = vpop.f32.mrb[0].mxu0
        %v1381 = vadd.f32 0.0, %v1380
        %v1382 = vpop.f32.mrb[0].mxu0
        %v1383 = vadd.f32 0.0, %v1382
        %v1384 = vpop.f32.mrb[0].mxu0
        %v1385 = vadd.f32 0.0, %v1384
        %v1386 = vpop.f32.mrb[0].mxu0
        %v1387 = vadd.f32 0.0, %v1386
        %1388 = vmatprep.mubr.bf16.mxu0 %v641
        %1389 = vmatmul.mubr.bf16.gmra.mrb[0].mxu0 %v640
        %v1390 = vpop.f32.mrb[0].mxu0
        %v1391 = vadd.f32 0.0, %v1390
        %v1392 = vpop.f32.mrb[0].mxu0
        %v1393 = vadd.f32 0.0, %v1392
        %v1394 = vpop.f32.mrb[0].mxu0
        %v1395 = vadd.f32 0.0, %v1394
        %v1396 = vpop.f32.mrb[0].mxu0
        %v1397 = vadd.f32 0.0, %v1396
        %1398 = vmatprep.mubr.bf16.mxu0 %v645
        %1399 = vmatmul.mubr.bf16.gmra.mrb[0].mxu0 %v644
        %v1400 = vpop.f32.mrb[0].mxu0
        %v1401 = vadd.f32 0.0, %v1400
        %v1402 = vpop.f32.mrb[0].mxu0
        %v1403 = vadd.f32 0.0, %v1402
        %v1404 = vpop.f32.mrb[0].mxu0
        %v1405 = vadd.f32 0.0, %v1404
        %v1406 = vpop.f32.mrb[0].mxu0
        %v1407 = vadd.f32 0.0, %v1406
        %1408 = vmatprep.mubr.bf16.mxu0 %v649
        %1409 = vmatmul.mubr.bf16.gmra.mrb[0].mxu0 %v648
        %v1410 = vpop.f32.mrb[0].mxu0
        %v1411 = vadd.f32 0.0, %v1410
        %v1412 = vpop.f32.mrb[0].mxu0
        %v1413 = vadd.f32 0.0, %v1412
        %v1414 = vpop.f32.mrb[0].mxu0
        %v1415 = vadd.f32 0.0, %v1414
        %v1416 = vpop.f32.mrb[0].mxu0
        %v1417 = vadd.f32 0.0, %v1416
        %1418 = vmatprep.mubr.bf16.mxu0 %v653
        %1419 = vmatmul.mubr.bf16.gmra.mrb[0].mxu0 %v652
        %v1420 = vpop.f32.mrb[0].mxu0
        %v1421 = vadd.f32 0.0, %v1420
        %v1422 = vpop.f32.mrb[0].mxu0
        %v1423 = vadd.f32 0.0, %v1422
        %v1424 = vpop.f32.mrb[0].mxu0
        %v1425 = vadd.f32 0.0, %v1424
        %v1426 = vpop.f32.mrb[0].mxu0
        %v1427 = vadd.f32 0.0, %v1426
        %1428 = vmatprep.mubr.bf16.mxu0 %v657
        %1429 = vmatmul.mubr.bf16.gmra.mrb[0].mxu0 %v656
        %v1430 = vpop.f32.mrb[0].mxu0
        %v1431 = vadd.f32 0.0, %v1430
        %v1432 = vpop.f32.mrb[0].mxu0
        %v1433 = vadd.f32 0.0, %v1432
        %v1434 = vpop.f32.mrb[0].mxu0
        %v1435 = vadd.f32 0.0, %v1434
        %v1436 = vpop.f32.mrb[0].mxu0
        %v1437 = vadd.f32 0.0, %v1436
        %1438 = vmatprep.mubr.bf16.mxu0 %v661
        %1439 = vmatmul.mubr.bf16.gmra.mrb[0].mxu0 %v660
        %v1440 = vpop.f32.mrb[0].mxu0
        %v1441 = vadd.f32 0.0, %v1440
        %v1442 = vpop.f32.mrb[0].mxu0
        %v1443 = vadd.f32 0.0, %v1442
        %v1444 = vpop.f32.mrb[0].mxu0
        %v1445 = vadd.f32 0.0, %v1444
        %v1446 = vpop.f32.mrb[0].mxu0
        %v1447 = vadd.f32 0.0, %v1446
        %1448 = vdwg.mxu0
        %1449 = vmatprep.subr.bf16.mxu0 %v1145
        %1450 = vmatpush1.bf16.msra.mxu0 %v1144
        %1451 = vmatprep.subr.bf16.mxu0 %v1149
        %1452 = vmatpush1.bf16.msra.mxu0 %v1148
        %1453 = vmatprep.subr.bf16.mxu0 %v1153
        %1454 = vmatpush1.bf16.msra.mxu0 %v1152
        %1455 = vmatprep.subr.bf16.mxu0 %v1157
        %1456 = vmatpush1.bf16.msra.mxu0 %v1156
        %1457 = vmatprep.subr.bf16.mxu0 %v1161
        %1458 = vmatpush1.bf16.msra.mxu0 %v1160
        %1459 = vmatprep.subr.bf16.mxu0 %v1165
        %1460 = vmatpush1.bf16.msra.mxu0 %v1164
        %1461 = vmatprep.subr.bf16.mxu0 %v1169
        %1462 = vmatpush1.bf16.msra.mxu0 %v1168
        %1463 = vmatprep.subr.bf16.mxu0 %v1173
        %1464 = vmatpush1.bf16.msra.mxu0 %v1172
        %1465 = vmatprep.subr.bf16.mxu0 %v1177
        %1466 = vmatpush1.bf16.msra.mxu0 %v1176
        %1467 = vmatprep.subr.bf16.mxu0 %v1181
        %1468 = vmatpush1.bf16.msra.mxu0 %v1180
        %1469 = vmatprep.subr.bf16.mxu0 %v1185
        %1470 = vmatpush1.bf16.msra.mxu0 %v1184
        %1471 = vmatprep.subr.bf16.mxu0 %v1189
        %1472 = vmatpush1.bf16.msra.mxu0 %v1188
        %1473 = vmatprep.subr.bf16.mxu0 %v1193
        %1474 = vmatpush1.bf16.msra.mxu0 %v1192
        %1475 = vmatprep.subr.bf16.mxu0 %v1197
        %1476 = vmatpush1.bf16.msra.mxu0 %v1196
        %1477 = vmatprep.subr.bf16.mxu0 %v1201
        %1478 = vmatpush1.bf16.msra.mxu0 %v1200
        %1479 = vmatprep.subr.bf16.mxu0 %v1205
        %1480 = vmatpush1.bf16.msra.mxu0 %v1204
        %1481 = vmatprep.mubr.bf16.mxu0 %v635
        %1482 = vmatmul.mubr.bf16.gmra.mrb[0].mxu0 %v634
        %v1483 = vpop.f32.mrb[0].mxu0
        %v1484 = vadd.f32 %v1371, %v1483
        %v1485 = vpop.f32.mrb[0].mxu0
        %v1486 = vadd.f32 %v1373, %v1485
        %v1487 = vpop.f32.mrb[0].mxu0
        %v1488 = vadd.f32 %v1375, %v1487
        %v1489 = vpop.f32.mrb[0].mxu0
        %v1490 = vadd.f32 %v1377, %v1489
        %1491 = vmatprep.mubr.bf16.mxu0 %v639
        %1492 = vmatmul.mubr.bf16.gmra.mrb[0].mxu0 %v638
        %v1493 = vpop.f32.mrb[0].mxu0
        %v1494 = vadd.f32 %v1381, %v1493
        %v1495 = vpop.f32.mrb[0].mxu0
        %v1496 = vadd.f32 %v1383, %v1495
        %v1497 = vpop.f32.mrb[0].mxu0
        %v1498 = vadd.f32 %v1385, %v1497
        %v1499 = vpop.f32.mrb[0].mxu0
        %v1500 = vadd.f32 %v1387, %v1499
        %1501 = vmatprep.mubr.bf16.mxu0 %v643
        %1502 = vmatmul.mubr.bf16.gmra.mrb[0].mxu0 %v642
        %v1503 = vpop.f32.mrb[0].mxu0
        %v1504 = vadd.f32 %v1391, %v1503
        %v1505 = vpop.f32.mrb[0].mxu0
        %v1506 = vadd.f32 %v1393, %v1505
        %v1507 = vpop.f32.mrb[0].mxu0
        %v1508 = vadd.f32 %v1395, %v1507
        %v1509 = vpop.f32.mrb[0].mxu0
        %v1510 = vadd.f32 %v1397, %v1509
        %1511 = vmatprep.mubr.bf16.mxu0 %v647
        %1512 = vmatmul.mubr.bf16.gmra.mrb[0].mxu0 %v646
        %v1513 = vpop.f32.mrb[0].mxu0
        %v1514 = vadd.f32 %v1401, %v1513
        %v1515 = vpop.f32.mrb[0].mxu0
        %v1516 = vadd.f32 %v1403, %v1515
        %v1517 = vpop.f32.mrb[0].mxu0
        %v1518 = vadd.f32 %v1405, %v1517
        %v1519 = vpop.f32.mrb[0].mxu0
        %v1520 = vadd.f32 %v1407, %v1519
        %1521 = vmatprep.mubr.bf16.mxu0 %v651
        %1522 = vmatmul.mubr.bf16.gmra.mrb[0].mxu0 %v650
        %v1523 = vpop.f32.mrb[0].mxu0
        %v1524 = vadd.f32 %v1411, %v1523
        %v1525 = vpop.f32.mrb[0].mxu0
        %v1526 = vadd.f32 %v1413, %v1525
        %v1527 = vpop.f32.mrb[0].mxu0
        %v1528 = vadd.f32 %v1415, %v1527
        %v1529 = vpop.f32.mrb[0].mxu0
        %v1530 = vadd.f32 %v1417, %v1529
        %1531 = vmatprep.mubr.bf16.mxu0 %v655
        %1532 = vmatmul.mubr.bf16.gmra.mrb[0].mxu0 %v654
        %v1533 = vpop.f32.mrb[0].mxu0
        %v1534 = vadd.f32 %v1421, %v1533
        %v1535 = vpop.f32.mrb[0].mxu0
        %v1536 = vadd.f32 %v1423, %v1535
        %v1537 = vpop.f32.mrb[0].mxu0
        %v1538 = vadd.f32 %v1425, %v1537
        %v1539 = vpop.f32.mrb[0].mxu0
        %v1540 = vadd.f32 %v1427, %v1539
        %1541 = vmatprep.mubr.bf16.mxu0 %v659
        %1542 = vmatmul.mubr.bf16.gmra.mrb[0].mxu0 %v658
        %v1543 = vpop.f32.mrb[0].mxu0
        %v1544 = vadd.f32 %v1431, %v1543
        %v1545 = vpop.f32.mrb[0].mxu0
        %v1546 = vadd.f32 %v1433, %v1545
        %v1547 = vpop.f32.mrb[0].mxu0
        %v1548 = vadd.f32 %v1435, %v1547
        %v1549 = vpop.f32.mrb[0].mxu0
        %v1550 = vadd.f32 %v1437, %v1549
        %1551 = vmatprep.mubr.bf16.mxu0 %v663
        %1552 = vmatmul.mubr.bf16.gmra.mrb[0].mxu0 %v662
        %v1553 = vpop.f32.mrb[0].mxu0
        %v1554 = vadd.f32 %v1441, %v1553
        %v1555 = vpop.f32.mrb[0].mxu0
        %v1556 = vadd.f32 %v1443, %v1555
        %v1557 = vpop.f32.mrb[0].mxu0
        %v1558 = vadd.f32 %v1445, %v1557
        %v1559 = vpop.f32.mrb[0].mxu0
        %v1560 = vadd.f32 %v1447, %v1559
        %1561 = vdwg.mxu0
        %1562 = vmatprep.subr.bf16.mxu0 %v1083
        %1563 = vmatpush1.bf16.msra.mxu0 %v1082
        %1564 = vmatprep.subr.bf16.mxu0 %v1087
        %1565 = vmatpush1.bf16.msra.mxu0 %v1086
        %1566 = vmatprep.subr.bf16.mxu0 %v1091
        %1567 = vmatpush1.bf16.msra.mxu0 %v1090
        %1568 = vmatprep.subr.bf16.mxu0 %v1095
        %1569 = vmatpush1.bf16.msra.mxu0 %v1094
        %1570 = vmatprep.subr.bf16.mxu0 %v1099
        %1571 = vmatpush1.bf16.msra.mxu0 %v1098
        %1572 = vmatprep.subr.bf16.mxu0 %v1103
        %1573 = vmatpush1.bf16.msra.mxu0 %v1102
        %1574 = vmatprep.subr.bf16.mxu0 %v1107
        %1575 = vmatpush1.bf16.msra.mxu0 %v1106
        %1576 = vmatprep.subr.bf16.mxu0 %v1111
        %1577 = vmatpush1.bf16.msra.mxu0 %v1110
        %1578 = vmatprep.subr.bf16.mxu0 %v1115
        %1579 = vmatpush1.bf16.msra.mxu0 %v1114
        %1580 = vmatprep.subr.bf16.mxu0 %v1119
        %1581 = vmatpush1.bf16.msra.mxu0 %v1118
        %1582 = vmatprep.subr.bf16.mxu0 %v1123
        %1583 = vmatpush1.bf16.msra.mxu0 %v1122
        %1584 = vmatprep.subr.bf16.mxu0 %v1127
        %1585 = vmatpush1.bf16.msra.mxu0 %v1126
        %1586 = vmatprep.subr.bf16.mxu0 %v1131
        %1587 = vmatpush1.bf16.msra.mxu0 %v1130
        %1588 = vmatprep.subr.bf16.mxu0 %v1135
        %1589 = vmatpush1.bf16.msra.mxu0 %v1134
        %1590 = vmatprep.subr.bf16.mxu0 %v1139
        %1591 = vmatpush1.bf16.msra.mxu0 %v1138
        %1592 = vmatprep.subr.bf16.mxu0 %v1143
        %1593 = vmatpush1.bf16.msra.mxu0 %v1142
        %1594 = vmatprep.mubr.bf16.mxu0 %v633
        %1595 = vmatmul.mubr.bf16.gmra.mrb[0].mxu0 %v632
        %v1596 = vpop.f32.mrb[0].mxu0
        %v1597 = vadd.f32 0.0, %v1596
        %v1598 = vpop.f32.mrb[0].mxu0
        %v1599 = vadd.f32 0.0, %v1598
        %v1600 = vpop.f32.mrb[0].mxu0
        %v1601 = vadd.f32 0.0, %v1600
        %v1602 = vpop.f32.mrb[0].mxu0
        %v1603 = vadd.f32 0.0, %v1602
        %1604 = vmatprep.mubr.bf16.mxu0 %v637
        %1605 = vmatmul.mubr.bf16.gmra.mrb[0].mxu0 %v636
        %v1606 = vpop.f32.mrb[0].mxu0
        %v1607 = vadd.f32 0.0, %v1606
        %v1608 = vpop.f32.mrb[0].mxu0
        %v1609 = vadd.f32 0.0, %v1608
        %v1610 = vpop.f32.mrb[0].mxu0
        %v1611 = vadd.f32 0.0, %v1610
        %v1612 = vpop.f32.mrb[0].mxu0
        %v1613 = vadd.f32 0.0, %v1612
        %1614 = vmatprep.mubr.bf16.mxu0 %v641
        %1615 = vmatmul.mubr.bf16.gmra.mrb[0].mxu0 %v640
        %v1616 = vpop.f32.mrb[0].mxu0
        %v1617 = vadd.f32 0.0, %v1616
        %v1618 = vpop.f32.mrb[0].mxu0
        %v1619 = vadd.f32 0.0, %v1618
        %v1620 = vpop.f32.mrb[0].mxu0
        %v1621 = vadd.f32 0.0, %v1620
        %v1622 = vpop.f32.mrb[0].mxu0
        %v1623 = vadd.f32 0.0, %v1622
        %1624 = vmatprep.mubr.bf16.mxu0 %v645
        %1625 = vmatmul.mubr.bf16.gmra.mrb[0].mxu0 %v644
        %v1626 = vpop.f32.mrb[0].mxu0
        %v1627 = vadd.f32 0.0, %v1626
        %v1628 = vpop.f32.mrb[0].mxu0
        %v1629 = vadd.f32 0.0, %v1628
        %v1630 = vpop.f32.mrb[0].mxu0
        %v1631 = vadd.f32 0.0, %v1630
        %v1632 = vpop.f32.mrb[0].mxu0
        %v1633 = vadd.f32 0.0, %v1632
        %1634 = vmatprep.mubr.bf16.mxu0 %v649
        %1635 = vmatmul.mubr.bf16.gmra.mrb[0].mxu0 %v648
        %v1636 = vpop.f32.mrb[0].mxu0
        %v1637 = vadd.f32 0.0, %v1636
        %v1638 = vpop.f32.mrb[0].mxu0
        %v1639 = vadd.f32 0.0, %v1638
        %v1640 = vpop.f32.mrb[0].mxu0
        %v1641 = vadd.f32 0.0, %v1640
        %v1642 = vpop.f32.mrb[0].mxu0
        %v1643 = vadd.f32 0.0, %v1642
        %1644 = vmatprep.mubr.bf16.mxu0 %v653
        %1645 = vmatmul.mubr.bf16.gmra.mrb[0].mxu0 %v652
        %v1646 = vpop.f32.mrb[0].mxu0
        %v1647 = vadd.f32 0.0, %v1646
        %v1648 = vpop.f32.mrb[0].mxu0
        %v1649 = vadd.f32 0.0, %v1648
        %v1650 = vpop.f32.mrb[0].mxu0
        %v1651 = vadd.f32 0.0, %v1650
        %v1652 = vpop.f32.mrb[0].mxu0
        %v1653 = vadd.f32 0.0, %v1652
        %1654 = vmatprep.mubr.bf16.mxu0 %v657
        %1655 = vmatmul.mubr.bf16.gmra.mrb[0].mxu0 %v656
        %v1656 = vpop.f32.mrb[0].mxu0
        %v1657 = vadd.f32 0.0, %v1656
        %v1658 = vpop.f32.mrb[0].mxu0
        %v1659 = vadd.f32 0.0, %v1658
        %v1660 = vpop.f32.mrb[0].mxu0
        %v1661 = vadd.f32 0.0, %v1660
        %v1662 = vpop.f32.mrb[0].mxu0
        %v1663 = vadd.f32 0.0, %v1662
        %1664 = vmatprep.mubr.bf16.mxu0 %v661
        %1665 = vmatmul.mubr.bf16.gmra.mrb[0].mxu0 %v660
        %v1666 = vpop.f32.mrb[0].mxu0
        %v1667 = vadd.f32 0.0, %v1666
        %v1668 = vpop.f32.mrb[0].mxu0
        %v1669 = vadd.f32 0.0, %v1668
        %v1670 = vpop.f32.mrb[0].mxu0
        %v1671 = vadd.f32 0.0, %v1670
        %v1672 = vpop.f32.mrb[0].mxu0
        %v1673 = vadd.f32 0.0, %v1672
        %1674 = vdwg.mxu0
        %1675 = vmatprep.subr.bf16.mxu0 %v1147
        %1676 = vmatpush1.bf16.msra.mxu0 %v1146
        %1677 = vmatprep.subr.bf16.mxu0 %v1151
        %1678 = vmatpush1.bf16.msra.mxu0 %v1150
        %1679 = vmatprep.subr.bf16.mxu0 %v1155
        %1680 = vmatpush1.bf16.msra.mxu0 %v1154
        %1681 = vmatprep.subr.bf16.mxu0 %v1159
        %1682 = vmatpush1.bf16.msra.mxu0 %v1158
        %1683 = vmatprep.subr.bf16.mxu0 %v1163
        %1684 = vmatpush1.bf16.msra.mxu0 %v1162
        %1685 = vmatprep.subr.bf16.mxu0 %v1167
        %1686 = vmatpush1.bf16.msra.mxu0 %v1166
        %1687 = vmatprep.subr.bf16.mxu0 %v1171
        %1688 = vmatpush1.bf16.msra.mxu0 %v1170
        %1689 = vmatprep.subr.bf16.mxu0 %v1175
        %1690 = vmatpush1.bf16.msra.mxu0 %v1174
        %1691 = vmatprep.subr.bf16.mxu0 %v1179
        %1692 = vmatpush1.bf16.msra.mxu0 %v1178
        %1693 = vmatprep.subr.bf16.mxu0 %v1183
        %1694 = vmatpush1.bf16.msra.mxu0 %v1182
        %1695 = vmatprep.subr.bf16.mxu0 %v1187
        %1696 = vmatpush1.bf16.msra.mxu0 %v1186
        %1697 = vmatprep.subr.bf16.mxu0 %v1191
        %1698 = vmatpush1.bf16.msra.mxu0 %v1190
        %1699 = vmatprep.subr.bf16.mxu0 %v1195
        %1700 = vmatpush1.bf16.msra.mxu0 %v1194
        %1701 = vmatprep.subr.bf16.mxu0 %v1199
        %1702 = vmatpush1.bf16.msra.mxu0 %v1198
        %1703 = vmatprep.subr.bf16.mxu0 %v1203
        %1704 = vmatpush1.bf16.msra.mxu0 %v1202
        %1705 = vmatprep.subr.bf16.mxu0 %v1207
        %1706 = vmatpush1.bf16.msra.mxu0 %v1206
        %1707 = vmatprep.mubr.bf16.mxu0 %v635
        %1708 = vmatmul.mubr.bf16.gmra.mrb[0].mxu0 %v634
        %v1709 = vpop.f32.mrb[0].mxu0
        %v1710 = vadd.f32 %v1597, %v1709
        %v1711 = vpop.f32.mrb[0].mxu0
        %v1712 = vadd.f32 %v1599, %v1711
        %v1713 = vpop.f32.mrb[0].mxu0
        %v1714 = vadd.f32 %v1601, %v1713
        %v1715 = vpop.f32.mrb[0].mxu0
        %v1716 = vadd.f32 %v1603, %v1715
        %1717 = vmatprep.mubr.bf16.mxu0 %v639
        %1718 = vmatmul.mubr.bf16.gmra.mrb[0].mxu0 %v638
        %v1719 = vpop.f32.mrb[0].mxu0
        %v1720 = vadd.f32 %v1607, %v1719
        %v1721 = vpop.f32.mrb[0].mxu0
        %v1722 = vadd.f32 %v1609, %v1721
        %v1723 = vpop.f32.mrb[0].mxu0
        %v1724 = vadd.f32 %v1611, %v1723
        %v1725 = vpop.f32.mrb[0].mxu0
        %v1726 = vadd.f32 %v1613, %v1725
        %1727 = vmatprep.mubr.bf16.mxu0 %v643
        %1728 = vmatmul.mubr.bf16.gmra.mrb[0].mxu0 %v642
        %v1729 = vpop.f32.mrb[0].mxu0
        %v1730 = vadd.f32 %v1617, %v1729
        %v1731 = vpop.f32.mrb[0].mxu0
        %v1732 = vadd.f32 %v1619, %v1731
        %v1733 = vpop.f32.mrb[0].mxu0
        %v1734 = vadd.f32 %v1621, %v1733
        %v1735 = vpop.f32.mrb[0].mxu0
        %v1736 = vadd.f32 %v1623, %v1735
        %1737 = vmatprep.mubr.bf16.mxu0 %v647
        %1738 = vmatmul.mubr.bf16.gmra.mrb[0].mxu0 %v646
        %v1739 = vpop.f32.mrb[0].mxu0
        %v1740 = vadd.f32 %v1627, %v1739
        %v1741 = vpop.f32.mrb[0].mxu0
        %v1742 = vadd.f32 %v1629, %v1741
        %v1743 = vpop.f32.mrb[0].mxu0
        %v1744 = vadd.f32 %v1631, %v1743
        %v1745 = vpop.f32.mrb[0].mxu0
        %v1746 = vadd.f32 %v1633, %v1745
        %1747 = vmatprep.mubr.bf16.mxu0 %v651
        %1748 = vmatmul.mubr.bf16.gmra.mrb[0].mxu0 %v650
        %v1749 = vpop.f32.mrb[0].mxu0
        %v1750 = vadd.f32 %v1637, %v1749
        %v1751 = vpop.f32.mrb[0].mxu0
        %v1752 = vadd.f32 %v1639, %v1751
        %v1753 = vpop.f32.mrb[0].mxu0
        %v1754 = vadd.f32 %v1641, %v1753
        %v1755 = vpop.f32.mrb[0].mxu0
        %v1756 = vadd.f32 %v1643, %v1755
        %1757 = vmatprep.mubr.bf16.mxu0 %v655
        %1758 = vmatmul.mubr.bf16.gmra.mrb[0].mxu0 %v654
        %v1759 = vpop.f32.mrb[0].mxu0
        %v1760 = vadd.f32 %v1647, %v1759
        %v1761 = vpop.f32.mrb[0].mxu0
        %v1762 = vadd.f32 %v1649, %v1761
        %v1763 = vpop.f32.mrb[0].mxu0
        %v1764 = vadd.f32 %v1651, %v1763
        %v1765 = vpop.f32.mrb[0].mxu0
        %v1766 = vadd.f32 %v1653, %v1765
        %1767 = vmatprep.mubr.bf16.mxu0 %v659
        %1768 = vmatmul.mubr.bf16.gmra.mrb[0].mxu0 %v658
        %v1769 = vpop.f32.mrb[0].mxu0
        %v1770 = vadd.f32 %v1657, %v1769
        %v1771 = vpop.f32.mrb[0].mxu0
        %v1772 = vadd.f32 %v1659, %v1771
        %v1773 = vpop.f32.mrb[0].mxu0
        %v1774 = vadd.f32 %v1661, %v1773
        %v1775 = vpop.f32.mrb[0].mxu0
        %v1776 = vadd.f32 %v1663, %v1775
        %1777 = vmatprep.mubr.bf16.mxu0 %v663
        %1778 = vmatmul.mubr.bf16.gmra.mrb[0].mxu0 %v662
        %v1779 = vpop.f32.mrb[0].mxu0
        %v1780 = vadd.f32 %v1667, %v1779
        %v1781 = vpop.f32.mrb[0].mxu0
        %v1782 = vadd.f32 %v1669, %v1781
        %v1783 = vpop.f32.mrb[0].mxu0
        %v1784 = vadd.f32 %v1671, %v1783
        %v1785 = vpop.f32.mrb[0].mxu0
        %v1786 = vadd.f32 %v1673, %v1785
        %1787 = vdwg.mxu0
        %v1788 = vadd.f32 %v312, %v1484
        %v1789 = vadd.f32 %v313, %v1486
        %v1790 = vadd.f32 %v314, %v1710
        %v1791 = vadd.f32 %v315, %v1712
        %v1792 = vadd.f32 %v316, %v1488
        %v1793 = vadd.f32 %v317, %v1490
        %v1794 = vadd.f32 %v318, %v1714
        %v1795 = vadd.f32 %v319, %v1716
        %v1796 = vadd.f32 %v320, %v1494
        %v1797 = vadd.f32 %v321, %v1496
        %v1798 = vadd.f32 %v322, %v1720
        %v1799 = vadd.f32 %v323, %v1722
        %v1800 = vadd.f32 %v324, %v1498
        %v1801 = vadd.f32 %v325, %v1500
        %v1802 = vadd.f32 %v326, %v1724
        %v1803 = vadd.f32 %v327, %v1726
        %v1804 = vadd.f32 %v328, %v1504
        %v1805 = vadd.f32 %v329, %v1506
        %v1806 = vadd.f32 %v330, %v1730
        %v1807 = vadd.f32 %v331, %v1732
        %v1808 = vadd.f32 %v332, %v1508
        %v1809 = vadd.f32 %v333, %v1510
        %v1810 = vadd.f32 %v334, %v1734
        %v1811 = vadd.f32 %v335, %v1736
        %v1812 = vadd.f32 %v336, %v1514
        %v1813 = vadd.f32 %v337, %v1516
        %v1814 = vadd.f32 %v338, %v1740
        %v1815 = vadd.f32 %v339, %v1742
        %v1816 = vadd.f32 %v340, %v1518
        %v1817 = vadd.f32 %v341, %v1520
        %v1818 = vadd.f32 %v342, %v1744
        %v1819 = vadd.f32 %v343, %v1746
        %v1820 = vadd.f32 %v344, %v1524
        %v1821 = vadd.f32 %v345, %v1526
        %v1822 = vadd.f32 %v346, %v1750
        %v1823 = vadd.f32 %v347, %v1752
        %v1824 = vadd.f32 %v348, %v1528
        %v1825 = vadd.f32 %v349, %v1530
        %v1826 = vadd.f32 %v350, %v1754
        %v1827 = vadd.f32 %v351, %v1756
        %v1828 = vadd.f32 %v352, %v1534
        %v1829 = vadd.f32 %v353, %v1536
        %v1830 = vadd.f32 %v354, %v1760
        %v1831 = vadd.f32 %v355, %v1762
        %v1832 = vadd.f32 %v356, %v1538
        %v1833 = vadd.f32 %v357, %v1540
        %v1834 = vadd.f32 %v358, %v1764
        %v1835 = vadd.f32 %v359, %v1766
        %v1836 = vadd.f32 %v360, %v1544
        %v1837 = vadd.f32 %v361, %v1546
        %v1838 = vadd.f32 %v362, %v1770
        %v1839 = vadd.f32 %v363, %v1772
        %v1840 = vadd.f32 %v364, %v1548
        %v1841 = vadd.f32 %v365, %v1550
        %v1842 = vadd.f32 %v366, %v1774
        %v1843 = vadd.f32 %v367, %v1776
        %v1844 = vadd.f32 %v368, %v1554
        %v1845 = vadd.f32 %v369, %v1556
        %v1846 = vadd.f32 %v370, %v1780
        %v1847 = vadd.f32 %v371, %v1782
        %v1848 = vadd.f32 %v372, %v1558
        %v1849 = vadd.f32 %v373, %v1560
        %v1850 = vadd.f32 %v374, %v1784
        %v1851 = vadd.f32 %v375, %v1786
        %1852 = vst [vmem:[#allocation2] sm:$0xff] %v1788
        %1853 = vst [vmem:[#allocation2 + $0x8] sm:$0xff] %v1789
        %1854 = vst [vmem:[#allocation2 + $0x10] sm:$0xff] %v1790
        %1855 = vst [vmem:[#allocation2 + $0x18] sm:$0xff] %v1791
        %1856 = vst [vmem:[#allocation2 + $0x20] sm:$0xff] %v1792
        %1857 = vst [vmem:[#allocation2 + $0x28] sm:$0xff] %v1793
        %1858 = vst [vmem:[#allocation2 + $0x30] sm:$0xff] %v1794
        %1859 = vst [vmem:[#allocation2 + $0x38] sm:$0xff] %v1795
        %1860 = vst [vmem:[#allocation2 + $0x40] sm:$0xff] %v1796
        %1861 = vst [vmem:[#allocation2 + $0x48] sm:$0xff] %v1797
        %1862 = vst [vmem:[#allocation2 + $0x50] sm:$0xff] %v1798
        %1863 = vst [vmem:[#allocation2 + $0x58] sm:$0xff] %v1799
        %1864 = vst [vmem:[#allocation2 + $0x60] sm:$0xff] %v1800
        %1865 = vst [vmem:[#allocation2 + $0x68] sm:$0xff] %v1801
        %1866 = vst [vmem:[#allocation2 + $0x70] sm:$0xff] %v1802
        %1867 = vst [vmem:[#allocation2 + $0x78] sm:$0xff] %v1803
        %1868 = vst [vmem:[#allocation2 + $0x80] sm:$0xff] %v1804
        %1869 = vst [vmem:[#allocation2 + $0x88] sm:$0xff] %v1805
        %1870 = vst [vmem:[#allocation2 + $0x90] sm:$0xff] %v1806
        %1871 = vst [vmem:[#allocation2 + $0x98] sm:$0xff] %v1807
        %1872 = vst [vmem:[#allocation2 + $0xa0] sm:$0xff] %v1808
        %1873 = vst [vmem:[#allocation2 + $0xa8] sm:$0xff] %v1809
        %1874 = vst [vmem:[#allocation2 + $0xb0] sm:$0xff] %v1810
        %1875 = vst [vmem:[#allocation2 + $0xb8] sm:$0xff] %v1811
        %1876 = vst [vmem:[#allocation2 + $0xc0] sm:$0xff] %v1812
        %1877 = vst [vmem:[#allocation2 + $0xc8] sm:$0xff] %v1813
        %1878 = vst [vmem:[#allocation2 + $0xd0] sm:$0xff] %v1814
        %1879 = vst [vmem:[#allocation2 + $0xd8] sm:$0xff] %v1815
        %1880 = vst [vmem:[#allocation2 + $0xe0] sm:$0xff] %v1816
        %1881 = vst [vmem:[#allocation2 + $0xe8] sm:$0xff] %v1817
        %1882 = vst [vmem:[#allocation2 + $0xf0] sm:$0xff] %v1818
        %1883 = vst [vmem:[#allocation2 + $0xf8] sm:$0xff] %v1819
        %1884 = vst [vmem:[#allocation2 + $0x100] sm:$0xff] %v1820
        %1885 = vst [vmem:[#allocation2 + $0x108] sm:$0xff] %v1821
        %1886 = vst [vmem:[#allocation2 + $0x110] sm:$0xff] %v1822
        %1887 = vst [vmem:[#allocation2 + $0x118] sm:$0xff] %v1823
        %1888 = vst [vmem:[#allocation2 + $0x120] sm:$0xff] %v1824
        %1889 = vst [vmem:[#allocation2 + $0x128] sm:$0xff] %v1825
        %1890 = vst [vmem:[#allocation2 + $0x130] sm:$0xff] %v1826
        %1891 = vst [vmem:[#allocation2 + $0x138] sm:$0xff] %v1827
        %1892 = vst [vmem:[#allocation2 + $0x140] sm:$0xff] %v1828
        %1893 = vst [vmem:[#allocation2 + $0x148] sm:$0xff] %v1829
        %1894 = vst [vmem:[#allocation2 + $0x150] sm:$0xff] %v1830
        %1895 = vst [vmem:[#allocation2 + $0x158] sm:$0xff] %v1831
        %1896 = vst [vmem:[#allocation2 + $0x160] sm:$0xff] %v1832
        %1897 = vst [vmem:[#allocation2 + $0x168] sm:$0xff] %v1833
        %1898 = vst [vmem:[#allocation2 + $0x170] sm:$0xff] %v1834
        %1899 = vst [vmem:[#allocation2 + $0x178] sm:$0xff] %v1835
        %1900 = vst [vmem:[#allocation2 + $0x180] sm:$0xff] %v1836
        %1901 = vst [vmem:[#allocation2 + $0x188] sm:$0xff] %v1837
        %1902 = vst [vmem:[#allocation2 + $0x190] sm:$0xff] %v1838
        %1903 = vst [vmem:[#allocation2 + $0x198] sm:$0xff] %v1839
        %1904 = vst [vmem:[#allocation2 + $0x1a0] sm:$0xff] %v1840
        %1905 = vst [vmem:[#allocation2 + $0x1a8] sm:$0xff] %v1841
        %1906 = vst [vmem:[#allocation2 + $0x1b0] sm:$0xff] %v1842
        %1907 = vst [vmem:[#allocation2 + $0x1b8] sm:$0xff] %v1843
        %1908 = vst [vmem:[#allocation2 + $0x1c0] sm:$0xff] %v1844
        %1909 = vst [vmem:[#allocation2 + $0x1c8] sm:$0xff] %v1845
        %1910 = vst [vmem:[#allocation2 + $0x1d0] sm:$0xff] %v1846
        %1911 = vst [vmem:[#allocation2 + $0x1d8] sm:$0xff] %v1847
        %1912 = vst [vmem:[#allocation2 + $0x1e0] sm:$0xff] %v1848
        %1913 = vst [vmem:[#allocation2 + $0x1e8] sm:$0xff] %v1849
        %1914 = vst [vmem:[#allocation2 + $0x1f0] sm:$0xff] %v1850
        %1915 = vst [vmem:[#allocation2 + $0x1f8] sm:$0xff] %v1851
        %p1916 = scmp.eq.s32.totalorder %s26, 1
        // Predicated region
        $region45: #{tpu_custom_call.1} parent=31 // pred_check
          %p1917 = pneg %p1916
        $region46: #{tpu_custom_call.1} parent=31 // pred_check_branch
          %1919 = sbr.rel (%p1917) target = $region48
        $region47: #{tpu_custom_call.1} parent=31 // pred_region
          %v1920 = vld [vmem:[#allocation2] sm:$0xff]
          %v1921 = vld [vmem:[#allocation2 + $0x8] sm:$0xff]
          %v1922 = vld [vmem:[#allocation2 + $0x10] sm:$0xff]
          %v1923 = vld [vmem:[#allocation2 + $0x18] sm:$0xff]
          %v1924 = vld [vmem:[#allocation2 + $0x20] sm:$0xff]
          %v1925 = vld [vmem:[#allocation2 + $0x28] sm:$0xff]
          %v1926 = vld [vmem:[#allocation2 + $0x30] sm:$0xff]
          %v1927 = vld [vmem:[#allocation2 + $0x38] sm:$0xff]
          %v1928 = vld [vmem:[#allocation2 + $0x40] sm:$0xff]
          %v1929 = vld [vmem:[#allocation2 + $0x48] sm:$0xff]
          %v1930 = vld [vmem:[#allocation2 + $0x50] sm:$0xff]
          %v1931 = vld [vmem:[#allocation2 + $0x58] sm:$0xff]
          %v1932 = vld [vmem:[#allocation2 + $0x60] sm:$0xff]
          %v1933 = vld [vmem:[#allocation2 + $0x68] sm:$0xff]
          %v1934 = vld [vmem:[#allocation2 + $0x70] sm:$0xff]
          %v1935 = vld [vmem:[#allocation2 + $0x78] sm:$0xff]
          %v1936 = vld [vmem:[#allocation2 + $0x80] sm:$0xff]
          %v1937 = vld [vmem:[#allocation2 + $0x88] sm:$0xff]
          %v1938 = vld [vmem:[#allocation2 + $0x90] sm:$0xff]
          %v1939 = vld [vmem:[#allocation2 + $0x98] sm:$0xff]
          %v1940 = vld [vmem:[#allocation2 + $0xa0] sm:$0xff]
          %v1941 = vld [vmem:[#allocation2 + $0xa8] sm:$0xff]
          %v1942 = vld [vmem:[#allocation2 + $0xb0] sm:$0xff]
          %v1943 = vld [vmem:[#allocation2 + $0xb8] sm:$0xff]
          %v1944 = vld [vmem:[#allocation2 + $0xc0] sm:$0xff]
          %v1945 = vld [vmem:[#allocation2 + $0xc8] sm:$0xff]
          %v1946 = vld [vmem:[#allocation2 + $0xd0] sm:$0xff]
          %v1947 = vld [vmem:[#allocation2 + $0xd8] sm:$0xff]
          %v1948 = vld [vmem:[#allocation2 + $0xe0] sm:$0xff]
          %v1949 = vld [vmem:[#allocation2 + $0xe8] sm:$0xff]
          %v1950 = vld [vmem:[#allocation2 + $0xf0] sm:$0xff]
          %v1951 = vld [vmem:[#allocation2 + $0xf8] sm:$0xff]
          %v1952 = vld [vmem:[#allocation2 + $0x100] sm:$0xff]
          %v1953 = vld [vmem:[#allocation2 + $0x108] sm:$0xff]
          %v1954 = vld [vmem:[#allocation2 + $0x110] sm:$0xff]
          %v1955 = vld [vmem:[#allocation2 + $0x118] sm:$0xff]
          %v1956 = vld [vmem:[#allocation2 + $0x120] sm:$0xff]
          %v1957 = vld [vmem:[#allocation2 + $0x128] sm:$0xff]
          %v1958 = vld [vmem:[#allocation2 + $0x130] sm:$0xff]
          %v1959 = vld [vmem:[#allocation2 + $0x138] sm:$0xff]
          %v1960 = vld [vmem:[#allocation2 + $0x140] sm:$0xff]
          %v1961 = vld [vmem:[#allocation2 + $0x148] sm:$0xff]
          %v1962 = vld [vmem:[#allocation2 + $0x150] sm:$0xff]
          %v1963 = vld [vmem:[#allocation2 + $0x158] sm:$0xff]
          %v1964 = vld [vmem:[#allocation2 + $0x160] sm:$0xff]
          %v1965 = vld [vmem:[#allocation2 + $0x168] sm:$0xff]
          %v1966 = vld [vmem:[#allocation2 + $0x170] sm:$0xff]
          %v1967 = vld [vmem:[#allocation2 + $0x178] sm:$0xff]
          %v1968 = vld [vmem:[#allocation2 + $0x180] sm:$0xff]
          %v1969 = vld [vmem:[#allocation2 + $0x188] sm:$0xff]
          %v1970 = vld [vmem:[#allocation2 + $0x190] sm:$0xff]
          %v1971 = vld [vmem:[#allocation2 + $0x198] sm:$0xff]
          %v1972 = vld [vmem:[#allocation2 + $0x1a0] sm:$0xff]
          %v1973 = vld [vmem:[#allocation2 + $0x1a8] sm:$0xff]
          %v1974 = vld [vmem:[#allocation2 + $0x1b0] sm:$0xff]
          %v1975 = vld [vmem:[#allocation2 + $0x1b8] sm:$0xff]
          %v1976 = vld [vmem:[#allocation2 + $0x1c0] sm:$0xff]
          %v1977 = vld [vmem:[#allocation2 + $0x1c8] sm:$0xff]
          %v1978 = vld [vmem:[#allocation2 + $0x1d0] sm:$0xff]
          %v1979 = vld [vmem:[#allocation2 + $0x1d8] sm:$0xff]
          %v1980 = vld [vmem:[#allocation2 + $0x1e0] sm:$0xff]
          %v1981 = vld [vmem:[#allocation2 + $0x1e8] sm:$0xff]
          %v1982 = vld [vmem:[#allocation2 + $0x1f0] sm:$0xff]
          %v1983 = vld [vmem:[#allocation2 + $0x1f8] sm:$0xff]
          %v1984 = vld [vmem:[%s2] sm:$0xf]
          %v1986 = vlaneseq
          %v1987 = vshrl.u32 %v1986, 7
          %v1988 = vsub.s32 0, %v1987
          %v1989 = vrot.slane %v1984, %v1988
          %v1990 = vlaneseq
          %v1991 = vshrl.u32 %v1990, 7
          %v1992 = vsub.s32 1, %v1991
          %v1993 = vrot.slane %v1984, %v1992
          %v1994 = vlaneseq
          %v1995 = vshrl.u32 %v1994, 7
          %v1996 = vsub.s32 2, %v1995
          %v1997 = vrot.slane %v1984, %v1996
          %v1998 = vlaneseq
          %v1999 = vshrl.u32 %v1998, 7
          %v2000 = vsub.s32 3, %v1999
          %v2001 = vrot.slane %v1984, %v2000
          %v2006 = vadd.f32 %v1920, %v1989
          %v2007 = vadd.f32 %v1921, %v1993
          %v2008 = vadd.f32 %v1922, %v1997
          %v2009 = vadd.f32 %v1923, %v2001
          %v2010 = vadd.f32 %v1924, %v1989
          %v2011 = vadd.f32 %v1925, %v1993
          %v2012 = vadd.f32 %v1926, %v1997
          %v2013 = vadd.f32 %v1927, %v2001
          %v2014 = vadd.f32 %v1928, %v1989
          %v2015 = vadd.f32 %v1929, %v1993
          %v2016 = vadd.f32 %v1930, %v1997
          %v2017 = vadd.f32 %v1931, %v2001
          %v2018 = vadd.f32 %v1932, %v1989
          %v2019 = vadd.f32 %v1933, %v1993
          %v2020 = vadd.f32 %v1934, %v1997
          %v2021 = vadd.f32 %v1935, %v2001
          %v2022 = vadd.f32 %v1936, %v1989
          %v2023 = vadd.f32 %v1937, %v1993
          %v2024 = vadd.f32 %v1938, %v1997
          %v2025 = vadd.f32 %v1939, %v2001
          %v2026 = vadd.f32 %v1940, %v1989
          %v2027 = vadd.f32 %v1941, %v1993
          %v2028 = vadd.f32 %v1942, %v1997
          %v2029 = vadd.f32 %v1943, %v2001
          %v2030 = vadd.f32 %v1944, %v1989
          %v2031 = vadd.f32 %v1945, %v1993
          %v2032 = vadd.f32 %v1946, %v1997
          %v2033 = vadd.f32 %v1947, %v2001
          %v2034 = vadd.f32 %v1948, %v1989
          %v2035 = vadd.f32 %v1949, %v1993
          %v2036 = vadd.f32 %v1950, %v1997
          %v2037 = vadd.f32 %v1951, %v2001
          %v2038 = vadd.f32 %v1952, %v1989
          %v2039 = vadd.f32 %v1953, %v1993
          %v2040 = vadd.f32 %v1954, %v1997
          %v2041 = vadd.f32 %v1955, %v2001
          %v2042 = vadd.f32 %v1956, %v1989
          %v2043 = vadd.f32 %v1957, %v1993
          %v2044 = vadd.f32 %v1958, %v1997
          %v2045 = vadd.f32 %v1959, %v2001
          %v2046 = vadd.f32 %v1960, %v1989
          %v2047 = vadd.f32 %v1961, %v1993
          %v2048 = vadd.f32 %v1962, %v1997
          %v2049 = vadd.f32 %v1963, %v2001
          %v2050 = vadd.f32 %v1964, %v1989
          %v2051 = vadd.f32 %v1965, %v1993
          %v2052 = vadd.f32 %v1966, %v1997
          %v2053 = vadd.f32 %v1967, %v2001
          %v2054 = vadd.f32 %v1968, %v1989
          %v2055 = vadd.f32 %v1969, %v1993
          %v2056 = vadd.f32 %v1970, %v1997
          %v2057 = vadd.f32 %v1971, %v2001
          %v2058 = vadd.f32 %v1972, %v1989
          %v2059 = vadd.f32 %v1973, %v1993
          %v2060 = vadd.f32 %v1974, %v1997
          %v2061 = vadd.f32 %v1975, %v2001
          %v2062 = vadd.f32 %v1976, %v1989
          %v2063 = vadd.f32 %v1977, %v1993
          %v2064 = vadd.f32 %v1978, %v1997
          %v2065 = vadd.f32 %v1979, %v2001
          %v2066 = vadd.f32 %v1980, %v1989
          %v2067 = vadd.f32 %v1981, %v1993
          %v2068 = vadd.f32 %v1982, %v1997
          %v2069 = vadd.f32 %v1983, %v2001
          %2070 = vst [vmem:[#allocation8] sm:$0xff] %v2006
          %2071 = vst [vmem:[#allocation8 + $0x8] sm:$0xff] %v2007
          %2072 = vst [vmem:[#allocation8 + $0x10] sm:$0xff] %v2008
          %2073 = vst [vmem:[#allocation8 + $0x18] sm:$0xff] %v2009
          %2074 = vst [vmem:[#allocation8 + $0x20] sm:$0xff] %v2010
          %2075 = vst [vmem:[#allocation8 + $0x28] sm:$0xff] %v2011
          %2076 = vst [vmem:[#allocation8 + $0x30] sm:$0xff] %v2012
          %2077 = vst [vmem:[#allocation8 + $0x38] sm:$0xff] %v2013
          %2078 = vst [vmem:[#allocation8 + $0x40] sm:$0xff] %v2014
          %2079 = vst [vmem:[#allocation8 + $0x48] sm:$0xff] %v2015
          %2080 = vst [vmem:[#allocation8 + $0x50] sm:$0xff] %v2016
          %2081 = vst [vmem:[#allocation8 + $0x58] sm:$0xff] %v2017
          %2082 = vst [vmem:[#allocation8 + $0x60] sm:$0xff] %v2018
          %2083 = vst [vmem:[#allocation8 + $0x68] sm:$0xff] %v2019
          %2084 = vst [vmem:[#allocation8 + $0x70] sm:$0xff] %v2020
          %2085 = vst [vmem:[#allocation8 + $0x78] sm:$0xff] %v2021
          %2086 = vst [vmem:[#allocation8 + $0x80] sm:$0xff] %v2022
          %2087 = vst [vmem:[#allocation8 + $0x88] sm:$0xff] %v2023
          %2088 = vst [vmem:[#allocation8 + $0x90] sm:$0xff] %v2024
          %2089 = vst [vmem:[#allocation8 + $0x98] sm:$0xff] %v2025
          %2090 = vst [vmem:[#allocation8 + $0xa0] sm:$0xff] %v2026
          %2091 = vst [vmem:[#allocation8 + $0xa8] sm:$0xff] %v2027
          %2092 = vst [vmem:[#allocation8 + $0xb0] sm:$0xff] %v2028
          %2093 = vst [vmem:[#allocation8 + $0xb8] sm:$0xff] %v2029
          %2094 = vst [vmem:[#allocation8 + $0xc0] sm:$0xff] %v2030
          %2095 = vst [vmem:[#allocation8 + $0xc8] sm:$0xff] %v2031
          %2096 = vst [vmem:[#allocation8 + $0xd0] sm:$0xff] %v2032
          %2097 = vst [vmem:[#allocation8 + $0xd8] sm:$0xff] %v2033
          %2098 = vst [vmem:[#allocation8 + $0xe0] sm:$0xff] %v2034
          %2099 = vst [vmem:[#allocation8 + $0xe8] sm:$0xff] %v2035
          %2100 = vst [vmem:[#allocation8 + $0xf0] sm:$0xff] %v2036
          %2101 = vst [vmem:[#allocation8 + $0xf8] sm:$0xff] %v2037
          %2102 = vst [vmem:[#allocation8 + $0x100] sm:$0xff] %v2038
          %2103 = vst [vmem:[#allocation8 + $0x108] sm:$0xff] %v2039
          %2104 = vst [vmem:[#allocation8 + $0x110] sm:$0xff] %v2040
          %2105 = vst [vmem:[#allocation8 + $0x118] sm:$0xff] %v2041
          %2106 = vst [vmem:[#allocation8 + $0x120] sm:$0xff] %v2042
          %2107 = vst [vmem:[#allocation8 + $0x128] sm:$0xff] %v2043
          %2108 = vst [vmem:[#allocation8 + $0x130] sm:$0xff] %v2044
          %2109 = vst [vmem:[#allocation8 + $0x138] sm:$0xff] %v2045
          %2110 = vst [vmem:[#allocation8 + $0x140] sm:$0xff] %v2046
          %2111 = vst [vmem:[#allocation8 + $0x148] sm:$0xff] %v2047
          %2112 = vst [vmem:[#allocation8 + $0x150] sm:$0xff] %v2048
          %2113 = vst [vmem:[#allocation8 + $0x158] sm:$0xff] %v2049
          %2114 = vst [vmem:[#allocation8 + $0x160] sm:$0xff] %v2050
          %2115 = vst [vmem:[#allocation8 + $0x168] sm:$0xff] %v2051
          %2116 = vst [vmem:[#allocation8 + $0x170] sm:$0xff] %v2052
          %2117 = vst [vmem:[#allocation8 + $0x178] sm:$0xff] %v2053
          %2118 = vst [vmem:[#allocation8 + $0x180] sm:$0xff] %v2054
          %2119 = vst [vmem:[#allocation8 + $0x188] sm:$0xff] %v2055
          %2120 = vst [vmem:[#allocation8 + $0x190] sm:$0xff] %v2056
          %2121 = vst [vmem:[#allocation8 + $0x198] sm:$0xff] %v2057
          %2122 = vst [vmem:[#allocation8 + $0x1a0] sm:$0xff] %v2058
          %2123 = vst [vmem:[#allocation8 + $0x1a8] sm:$0xff] %v2059
          %2124 = vst [vmem:[#allocation8 + $0x1b0] sm:$0xff] %v2060
          %2125 = vst [vmem:[#allocation8 + $0x1b8] sm:$0xff] %v2061
          %2126 = vst [vmem:[#allocation8 + $0x1c0] sm:$0xff] %v2062
          %2127 = vst [vmem:[#allocation8 + $0x1c8] sm:$0xff] %v2063
          %2128 = vst [vmem:[#allocation8 + $0x1d0] sm:$0xff] %v2064
          %2129 = vst [vmem:[#allocation8 + $0x1d8] sm:$0xff] %v2065
          %2130 = vst [vmem:[#allocation8 + $0x1e0] sm:$0xff] %v2066
          %2131 = vst [vmem:[#allocation8 + $0x1e8] sm:$0xff] %v2067
          %2132 = vst [vmem:[#allocation8 + $0x1f0] sm:$0xff] %v2068
          %2133 = vst [vmem:[#allocation8 + $0x1f8] sm:$0xff] %v2069
        $region48: #{tpu_custom_call.1} parent=31 // pred_fallthru
          _
        // Predicated region
        $region49: #{tpu_custom_call.1} parent=31 // pred_check
          %p2134 = pneg %p126
        $region50: #{tpu_custom_call.1} parent=31 // pred_check_branch
          %2136 = sbr.rel (%p2134) target = $region52
        $region51: #{tpu_custom_call.1} parent=31 // pred_region
          %s2137 = smul.u32 16, %s25
          %s2139 = ssub.s32 8192, 8192
          %2140 = vsyncadd [#allocation5], %s2139
          %s2141 = smul.addr %s2137, 4
          %s2142 = smul.addr %s2141, 128
          %s2143 = scalar_lea.hbm %s3, %s2142
          %s2144 = sshll.u32 [#allocation8], 4
          %s2145 = int_to_ptr.vmem [resolvable:$true] %s2144
          %2150 = dma.vmem_to_hbm [thread:$0]  %s2145, 8192, %s2143, [#allocation5], 512, 512, 32
        $region52: #{tpu_custom_call.1} parent=31 // pred_fallthru
          _
        // Predicated region
        $region53: #{tpu_custom_call.1} parent=31 // pred_check
          %p2151 = pneg %p126
        $region54: #{tpu_custom_call.1} parent=31 // pred_check_branch
          %2153 = sbr.rel (%p2151) target = $region56
        $region55: #{tpu_custom_call.1} parent=31 // pred_region
          %2154 = dma.done [#allocation5], 8192
        $region56: #{tpu_custom_call.1} parent=31 // pred_fallthru
          _
      $region32: #{tpu_custom_call.1} parent=5 // pred_fallthru
        _
      %p2155 = scmp.le.s32.totalorder 2, %s16
      // Predicated region
      $region57: #{tpu_custom_call.1} parent=5 // pred_check
        %p2156 = pneg %p2155
      $region58: #{tpu_custom_call.1} parent=5 // pred_check_branch
        %2158 = sbr.rel (%p2156) target = $region60
      $region59: #{tpu_custom_call.1} parent=5 // pred_region
        %s2159 = ssub.s32 %s16, 2
      $region60: #{tpu_custom_call.1} parent=5 // pred_fallthru
        _
    $region6: #{tpu_custom_call.1} parent=1 // loop_footer
      %s20 = sadd.s32 1, %s16
    $region7: #{tpu_custom_call.1} parent=1 // loop_footer_branch
      %15 = sbr.rel target = $region3
    $region8: #{tpu_custom_call.1} parent=1 // loop_exit
      _
    %2160 = vsyncpa [#allocation4], 1
    %s2161 = scalar_lea.sflag [#allocation4], 1
    %2162 = vsyncpa %s2161, 1
    %2163 = vsyncpa [#allocation7], 1
    %s2164 = scalar_lea.sflag [#allocation7], 1
    %2165 = vsyncpa %s2164, 1
    %2166 = vsyncpa [#allocation5], 1
    %s2167 = scalar_lea.sflag [#allocation5], 1
    %2168 = vsyncpa %s2167, 1

</llo_original>
